<compile_context>
chip_gen: v7x
topology: tpu7x:2x2x1
jax: 0.10.0
libtpu: 0.0.40
codegen_flags: <defaults>
</compile_context>

<pallas_src>
import math
from functools import partial

import jax
import jax.numpy as jnp
import numpy as np
from jax import lax
from jax.experimental import pallas as pl
from jax.experimental.pallas import tpu as pltpu

# ---- small, TPU-friendly problem sizes ------------------------------------
B = 2             # batch
L = 8             # sequence length
BL = B * L        # batch folded into the sublane (row) axis
E = 64            # synthetic ESM2 embed_dim (stand-in for 320)
D = 128           # fusion_dim (stand-in for 512, lane aligned)
H = 4             # fusion_num_heads
HD = D // H       # head dim
MAX_DISTANCE = 40
N_DIST = MAX_DISTANCE // 8      # 5 distance bins
N_ANGLE = 24                    # num_angle_bins
ANGLE_OUT = 2 * N_ANGLE         # 48
ANGLE_PAD = 128                 # angle block padded to a full lane tile
VOCAB = 33                      # ESM2 alphabet size
LN_EPS = 1e-5
NEG_INF = -1e30

# packed lane-dense output layout: one (BL, 128) f32 slab
OUT_W = 128
COL_ANGLE = 0                            # [0, 48)  angle logits
COL_CONTACT = ANGLE_OUT                  # [48, 56) row b*L+i holds contact[b, i, :]
COL_DIST = ANGLE_OUT + L                 # [56, 66) da | db (distance head halves)
COL_PAD = COL_DIST + 2 * N_DIST          # [66, 128) zero pad
HEAD_PAD = 2 * D                         # [Wb | Wd1 | Wd2] padded to 256 lanes


# ---------------------------------------------------------------------------
# Single fused kernel: one wide projection matmul -> CrossFusion -> all heads
# ---------------------------------------------------------------------------
def _fused_kernel(x_ref, wbig_ref, bbig_ref, mask_ref, wo_ref, bo_ref,
                  gamma_ref, beta_ref, whead_ref, bb_ref, out_ref):
    f32, bf16 = jnp.float32, jnp.bfloat16
    dotf = partial(jnp.dot, preferred_element_type=f32)
    contract_last = (((1,), (1,)), ((), ()))          # contract last dim of both

    # ---- ONE wide matmul: x @ [Wc | Wq*scale | Wk | Wv | Wangle] ----
    x = x_ref[...].astype(bf16)                                   # (BL, E)
    big = dotf(x, wbig_ref[...]) + bbig_ref[...]                  # (BL, 5*128) f32
    c = big[:, 0 * D:1 * D]                                       # contact embedding
    q = big[:, 1 * D:2 * D].astype(bf16)                          # pre-scaled query
    k = big[:, 2 * D:3 * D].astype(bf16)
    v = big[:, 3 * D:4 * D].astype(bf16)
    angle = big[:, 4 * D:4 * D + ANGLE_OUT]                       # angle logits (f32)

    # ---- CrossFusion MHA; heads accumulated into the out-projection ----
    wo = wo_ref[...]                                              # (D, D) bf16
    neg = mask_ref[...]                                           # (BL, BL) additive batch mask
    attn = jnp.zeros((BL, D), f32)
    for h in range(H):                                            # static head loop
        sl = slice(h * HD, (h + 1) * HD)
        scores = lax.dot_general(q[:, sl], k[:, sl], contract_last,
                                 preferred_element_type=f32) + neg
        scores = scores - jnp.max(scores, axis=-1, keepdims=True)
        p = jnp.exp(scores)                                       # f32 softmax
        probs = p * pl.reciprocal(jnp.sum(p, axis=-1, keepdims=True), approx=True)
        head = dotf(probs.astype(bf16), v[:, sl])                 # (BL, HD)
        attn = attn + dotf(head.astype(bf16), wo[sl, :])          # (BL, D), no concat
    attn = attn + bo_ref[...]

    # ---- residual + LayerNorm (f32) ----
    xr = c + attn
    mean = jnp.mean(xr, axis=-1, keepdims=True)
    var = jnp.mean((xr - mean) ** 2, axis=-1, keepdims=True)
    fused = (xr - mean) * lax.rsqrt(var + LN_EPS) * gamma_ref[...] + beta_ref[...]

    # ---- heads on `fused`: one matmul against [Wb | Wd1 | Wd2 | 0-pad] ----
    r = dotf(fused.astype(bf16), whead_ref[...])                  # (BL, 256) f32
    t = r[:, :D]                                                  # fused @ Wb
    dadb = r[:, D:D + 2 * N_DIST]                                 # da | db  (BL, 10)

    # per-batch bilinear contact blocks only (no wasted cross-batch logits)
    bb = bb_ref[0, 0]
    blocks = []
    for bi in range(B):                                           # static batch loop
        rs = slice(bi * L, (bi + 1) * L)
        blocks.append(lax.dot_general(t[rs].astype(bf16), fused[rs].astype(bf16),
                                      contract_last, preferred_element_type=f32) + bb)
    contact = jnp.concatenate(blocks, axis=0)                     # (BL, L)

    # ---- single lane-dense 128-wide output write ----
    pad = jnp.zeros((BL, OUT_W - COL_PAD), f32)
    out_ref[...] = jnp.concatenate([angle, contact, dadb, pad], axis=-1)


# ---------------------------------------------------------------------------
# Wrapper: full forward (one pallas_call), slab unpacking in plain XLA
# ---------------------------------------------------------------------------
def multi_task_forward(sequence_tokens, fp):
    # TODO(synk): synthetic ESM2 representation (deterministic embedding lookup).
    x = fp["emb"][sequence_tokens].reshape(BL, E)

    vmem = pl.BlockSpec(memory_space=pltpu.MemorySpace.VMEM)
    smem = pl.BlockSpec(memory_space=pltpu.MemorySpace.SMEM)

    packed = pl.pallas_call(
        _fused_kernel,
        out_shape=jax.ShapeDtypeStruct((BL, OUT_W), jnp.float32),
        in_specs=[vmem] * 9 + [smem],
        out_specs=vmem,
    )(x, fp["wbig"], fp["bbig"], fp["mask"], fp["wo"], fp["bo"],
      fp["gamma"], fp["beta"], fp["whead"], fp["bb"])

    angle = packed[:, COL_ANGLE:COL_ANGLE + ANGLE_OUT].reshape(B, L, 2, N_ANGLE)
    contact = packed[:, COL_CONTACT:COL_CONTACT + L].reshape(B, L, L)
    da = packed[:, COL_DIST:COL_DIST + N_DIST].reshape(B, L, N_DIST)
    db = packed[:, COL_DIST + N_DIST:COL_PAD].reshape(B, L, N_DIST)
    dist = da[:, :, None, :] + db[:, None, :, :] + fp["bdh"][0]   # (B, L, L, N_DIST)

    return {"contact_logits": contact, "distance_logits": dist, "angle_logits": angle}


# ---------------------------------------------------------------------------
# prepare_params: host-side, one-time weight folding / padding / bf16 casting
# ---------------------------------------------------------------------------
def prepare_params(p):
    f32, bf16 = jnp.float32, jnp.bfloat16
    scale = 1.0 / math.sqrt(HD)

    # c = s@wc+bc, s = x@wseq+bseq  ->  c = x@(wseq@wc) + (bseq@wc + bc), etc.
    w_c = p["wseq"] @ p["wc"]
    b_c = p["bseq"] @ p["wc"] + p["bc"]
    w_q = (w_c @ p["wq"]) * scale                         # softmax scale folded in
    b_q = (b_c @ p["wq"] + p["bq"]) * scale
    w_ex = p["wseq"] @ (0.5 * (p["wd"] + p["wa"]))        # extra = mean(d, a)
    b_ex = p["bseq"] @ (0.5 * (p["wd"] + p["wa"])) + 0.5 * (p["bdp"] + p["ba"])
    w_k = w_ex @ p["wk"]
    b_k = b_ex @ p["wk"] + p["bk"]
    w_v = w_ex @ p["wv"]
    b_v = b_ex @ p["wv"] + p["bv"]
    w_ang = p["wseq"] @ (p["wa"] @ p["wah"])              # angle head folded in
    b_ang = (p["bseq"] @ p["wa"] + p["ba"]) @ p["wah"] + p["bah"]

    padw = jnp.zeros((E, ANGLE_PAD - ANGLE_OUT), f32)
    padb = jnp.zeros((1, ANGLE_PAD - ANGLE_OUT), f32)

    q = {}
    q["emb"] = p["emb"]
    q["wbig"] = jnp.concatenate([w_c, w_q, w_k, w_v, w_ang, padw], axis=1).astype(bf16)  # (E, 640)
    q["bbig"] = jnp.concatenate([b_c, b_q, b_k, b_v, b_ang, padb], axis=1)               # (1, 640) f32
    q["wo"] = p["wo"].astype(bf16)
    q["bo"] = p["bo"]
    q["gamma"], q["beta"] = p["gamma"], p["beta"]
    whead = jnp.concatenate([p["wb"], p["wd1"], p["wd2"]], axis=1)                       # (D, D+10)
    q["whead"] = jnp.pad(whead, ((0, 0), (0, HEAD_PAD - whead.shape[1]))).astype(bf16)   # (D, 256)
    q["bb"] = p["bb"]                                     # scalar bilinear bias (SMEM)
    q["bdh"] = p["bdh"]                                   # distance bias (wrapper-side)
    # compile-time block-diagonal batch mask (batch folded into rows)
    rb = np.arange(BL)[:, None] // L
    cb = np.arange(BL)[None, :] // L
    q["mask"] = jnp.asarray(np.where(rb == cb, 0.0, NEG_INF), f32)
    return q


# ---------------------------------------------------------------------------
# Pure-JAX f32 reference (same math, unfused params) for verification
# ---------------------------------------------------------------------------
def reference_forward(tokens, p):
    hi = jax.lax.Precision.HIGHEST
    dot = partial(jnp.matmul, precision=hi)
    x = p["emb"][tokens]                                     # (B, L, E)
    s = dot(x, p["wseq"]) + p["bseq"]
    c = dot(s, p["wc"]) + p["bc"]
    d = dot(s, p["wd"]) + p["bdp"]
    a = dot(s, p["wa"]) + p["ba"]
    extra = 0.5 * (d + a)

    qq = dot(c, p["wq"]) + p["bq"]
    kk = dot(extra, p["wk"]) + p["bk"]
    vv = dot(extra, p["wv"]) + p["bv"]
    qh = qq.reshape(B, L, H, HD).transpose(0, 2, 1, 3)
    kh = kk.reshape(B, L, H, HD).transpose(0, 2, 1, 3)
    vh = vv.reshape(B, L, H, HD).transpose(0, 2, 1, 3)
    scores = jnp.einsum("bhqd,bhkd->bhqk", qh, kh, precision=hi) / math.sqrt(HD)
    probs = jax.nn.softmax(scores, axis=-1)
    attn = jnp.einsum("bhqk,bhkd->bhqd", probs, vh, precision=hi)
    attn = attn.transpose(0, 2, 1, 3).reshape(B, L, D)
    attn = dot(attn, p["wo"]) + p["bo"]
    xres = c + attn
    mean = xres.mean(-1, keepdims=True)
    var = ((xres - mean) ** 2).mean(-1, keepdims=True)
    fused = (xres - mean) / jnp.sqrt(var + LN_EPS) * p["gamma"] + p["beta"]

    t = jnp.einsum("bld,de->ble", fused, p["wb"], precision=hi)
    contact = jnp.einsum("bie,bje->bij", t, fused, precision=hi) + p["bb"][0, 0]
    A = dot(fused, p["wd1"])
    Bm = dot(fused, p["wd2"])
    dist = A[:, :, None, :] + Bm[:, None, :, :] + p["bdh"][0]
    angle = (dot(a, p["wah"]) + p["bah"]).reshape(B, L, 2, N_ANGLE)
    return {"contact_logits": contact, "distance_logits": dist, "angle_logits": angle}


# ---------------------------------------------------------------------------
# Deterministic parameter initialization (synthetic, no checkpoint)
# ---------------------------------------------------------------------------
def init_params(key):
    ks = iter(jax.random.split(key, 32))
    lin = lambda k, fan_in, shape: (jax.random.normal(k, shape, jnp.float32)
                                    / math.sqrt(fan_in))
    p = {}
    p["emb"] = jax.random.normal(next(ks), (VOCAB, E), jnp.float32)   # synthetic ESM2 repr
    p["wseq"], p["bseq"] = lin(next(ks), E, (E, D)), lin(next(ks), E, (1, D))
    p["wc"], p["bc"] = lin(next(ks), D, (D, D)), lin(next(ks), D, (1, D))
    p["wd"], p["bdp"] = lin(next(ks), D, (D, D)), lin(next(ks), D, (1, D))
    p["wa"], p["ba"] = lin(next(ks), D, (D, D)), lin(next(ks), D, (1, D))
    # angle head: Linear(D -> 2*num_angle_bins)
    p["wah"], p["bah"] = lin(next(ks), D, (D, ANGLE_OUT)), lin(next(ks), D, (1, ANGLE_OUT))
    # CrossFusion MultiheadAttention (q/k/v/out projections) + LayerNorm
    p["wq"], p["bq"] = lin(next(ks), D, (D, D)), lin(next(ks), D, (1, D))
    p["wk"], p["bk"] = lin(next(ks), D, (D, D)), lin(next(ks), D, (1, D))
    p["wv"], p["bv"] = lin(next(ks), D, (D, D)), lin(next(ks), D, (1, D))
    p["wo"], p["bo"] = lin(next(ks), D, (D, D)), lin(next(ks), D, (1, D))
    p["gamma"] = 1.0 + 0.1 * jax.random.normal(next(ks), (1, D), jnp.float32)
    p["beta"] = 0.05 * jax.random.normal(next(ks), (1, D), jnp.float32)
    # contact head: Bilinear(D, D, 1) -> weight (D, D), scalar bias
    p["wb"] = lin(next(ks), D, (D, D))
    p["bb"] = lin(next(ks), D, (1, 1))
    # distance head: Linear(2D -> N_DIST), stored split as (D, N_DIST) halves
    p["wd1"] = lin(next(ks), 2 * D, (D, N_DIST))
    p["wd2"] = lin(next(ks), 2 * D, (D, N_DIST))
    p["bdh"] = lin(next(ks), 2 * D, (1, N_DIST))
    return p


if __name__ == "__main__":
    key = jax.random.PRNGKey(0)
    pkey, tkey = jax.random.split(key)
    params = init_params(pkey)
    fused_params = prepare_params(params)
    sequence_tokens = jax.random.randint(tkey, (B, L), 0, VOCAB, dtype=jnp.int32)

    fwd = jax.jit(multi_task_forward)
    outs = jax.block_until_ready(fwd(sequence_tokens, fused_params))

    # Sanity check against the pure-JAX f32 reference (unfused params).
    # Tolerances are sized for bf16 MXU operands (perf-feedback item): the
    # contact logits are a D=128 bilinear at the end of a folded matmul chain
    # (std ~ sqrt(D) ~ 11, range ~ +-35), so their absolute tolerance scales
    # with that dynamic range; any structural bug produces O(10) errors.
    ref = reference_forward(sequence_tokens, params)
    tol = {
        "contact_logits": (5e-2, 1.5),
        "distance_logits": (5e-2, 0.15),
        "angle_logits": (5e-2, 0.1),
    }
    for name, (rt, at) in tol.items():
        np.testing.assert_allclose(np.asarray(outs[name]), np.asarray(ref[name]),
                                   rtol=rt, atol=at, err_msg=name)

    assert outs["contact_logits"].shape == (B, L, L)
    assert outs["distance_logits"].shape == (B, L, L, N_DIST)
    assert outs["angle_logits"].shape == (B, L, 2, N_ANGLE)
    print("KERNEL_OK")
</pallas_src>

<mosaic_0001>
module attributes {stable_mosaic.version = 11 : i64} {
  func.func @_fused_kernel(%arg0: memref<16x64xf32, #tpu.memory_space<vmem>>, %arg1: memref<64x640xbf16, #tpu.memory_space<vmem>>, %arg2: memref<1x640xf32, #tpu.memory_space<vmem>>, %arg3: memref<16x16xf32, #tpu.memory_space<vmem>>, %arg4: memref<128x128xbf16, #tpu.memory_space<vmem>>, %arg5: memref<1x128xf32, #tpu.memory_space<vmem>>, %arg6: memref<1x128xf32, #tpu.memory_space<vmem>>, %arg7: memref<1x128xf32, #tpu.memory_space<vmem>>, %arg8: memref<128x256xbf16, #tpu.memory_space<vmem>>, %arg9: memref<1x1xf32, #tpu.memory_space<smem>>, %arg10: memref<16x128xf32, #tpu.memory_space<vmem>>) attributes {dimension_semantics = [], scalar_prefetch = 0 : i64, scratch_operands = 0 : i64, tpu.core_type = #tpu.core_type<tc>} {
    %c0 = arith.constant 0 : index
    %c0_0 = arith.constant 0 : index
    %0 = vector.load %arg0[%c0, %c0_0] : memref<16x64xf32, #tpu.memory_space<vmem>>, vector<16x64xf32>
    %1 = arith.truncf %0 : vector<16x64xf32> to vector<16x64xbf16>
    %c0_1 = arith.constant 0 : index
    %c0_2 = arith.constant 0 : index
    %2 = vector.load %arg1[%c0_1, %c0_2] : memref<64x640xbf16, #tpu.memory_space<vmem>>, vector<64x640xbf16>
    %cst = arith.constant dense<0.000000e+00> : vector<16x640xf32>
    %3 = tpu.matmul %1, %2, %cst {dimension_numbers = #tpu.dot_dimension_numbers<[1], [0], [0], [1], [0, 0, 1, 1], [], []>} : vector<16x64xbf16>, vector<64x640xbf16>, vector<16x640xf32> -> vector<16x640xf32>
    %c0_3 = arith.constant 0 : index
    %c0_4 = arith.constant 0 : index
    %4 = vector.load %arg2[%c0_3, %c0_4] : memref<1x640xf32, #tpu.memory_space<vmem>>, vector<1x640xf32>
    %5 = vector.broadcast %4 : vector<1x640xf32> to vector<16x640xf32>
    %6 = arith.addf %3, %5 : vector<16x640xf32>
    %7 = vector.extract_strided_slice %6 {offsets = [0, 0], sizes = [16, 128], strides = [1, 1]} : vector<16x640xf32> to vector<16x128xf32>
    %8 = vector.extract_strided_slice %6 {offsets = [0, 128], sizes = [16, 128], strides = [1, 1]} : vector<16x640xf32> to vector<16x128xf32>
    %9 = arith.truncf %8 : vector<16x128xf32> to vector<16x128xbf16>
    %10 = vector.extract_strided_slice %6 {offsets = [0, 256], sizes = [16, 128], strides = [1, 1]} : vector<16x640xf32> to vector<16x128xf32>
    %11 = arith.truncf %10 : vector<16x128xf32> to vector<16x128xbf16>
    %12 = vector.extract_strided_slice %6 {offsets = [0, 384], sizes = [16, 128], strides = [1, 1]} : vector<16x640xf32> to vector<16x128xf32>
    %13 = arith.truncf %12 : vector<16x128xf32> to vector<16x128xbf16>
    %14 = vector.extract_strided_slice %6 {offsets = [0, 512], sizes = [16, 48], strides = [1, 1]} : vector<16x640xf32> to vector<16x48xf32>
    %c0_5 = arith.constant 0 : index
    %c0_6 = arith.constant 0 : index
    %15 = vector.load %arg4[%c0_5, %c0_6] : memref<128x128xbf16, #tpu.memory_space<vmem>>, vector<128x128xbf16>
    %c0_7 = arith.constant 0 : index
    %c0_8 = arith.constant 0 : index
    %16 = vector.load %arg3[%c0_7, %c0_8] : memref<16x16xf32, #tpu.memory_space<vmem>>, vector<16x16xf32>
    %cst_9 = arith.constant 0.000000e+00 : f32
    %17 = vector.broadcast %cst_9 : f32 to vector<16x128xf32>
    %18 = vector.extract_strided_slice %9 {offsets = [0, 0], sizes = [16, 32], strides = [1, 1]} : vector<16x128xbf16> to vector<16x32xbf16>
    %19 = vector.extract_strided_slice %11 {offsets = [0, 0], sizes = [16, 32], strides = [1, 1]} : vector<16x128xbf16> to vector<16x32xbf16>
    %cst_10 = arith.constant dense<0.000000e+00> : vector<16x16xf32>
    %20 = tpu.matmul %18, %19, %cst_10 {dimension_numbers = #tpu.dot_dimension_numbers<[1], [1], [0], [0], [0, 0, 1, 0], [], []>} : vector<16x32xbf16>, vector<16x32xbf16>, vector<16x16xf32> -> vector<16x16xf32>
    %21 = arith.addf %20, %16 : vector<16x16xf32>
    %cst_11 = arith.constant dense<0xFF800000> : vector<16xf32>
    %22 = vector.multi_reduction <maximumf>, %21, %cst_11 [1] : vector<16x16xf32> to vector<16xf32>
    %23 = vector.shape_cast %22 : vector<16xf32> to vector<16x1xf32>
    %24 = vector.broadcast %23 : vector<16x1xf32> to vector<16x16xf32>
    %25 = arith.subf %21, %24 : vector<16x16xf32>
    %26 = math.exp %25 : vector<16x16xf32>
    %cst_12 = arith.constant dense<0.000000e+00> : vector<16xf32>
    %27 = vector.multi_reduction <add>, %26, %cst_12 [1] : vector<16x16xf32> to vector<16xf32>
    %28 = vector.shape_cast %27 : vector<16xf32> to vector<16x1xf32>
    %29 = tpu.reciprocal %28 {approx = true} : vector<16x1xf32> -> vector<16x1xf32>
    %30 = vector.broadcast %29 : vector<16x1xf32> to vector<16x16xf32>
    %31 = arith.mulf %26, %30 : vector<16x16xf32>
    %32 = arith.truncf %31 : vector<16x16xf32> to vector<16x16xbf16>
    %33 = vector.extract_strided_slice %13 {offsets = [0, 0], sizes = [16, 32], strides = [1, 1]} : vector<16x128xbf16> to vector<16x32xbf16>
    %cst_13 = arith.constant dense<0.000000e+00> : vector<16x32xf32>
    %34 = tpu.matmul %32, %33, %cst_13 {dimension_numbers = #tpu.dot_dimension_numbers<[1], [0], [0], [1], [0, 0, 1, 1], [], []>} : vector<16x16xbf16>, vector<16x32xbf16>, vector<16x32xf32> -> vector<16x32xf32>
    %35 = arith.truncf %34 : vector<16x32xf32> to vector<16x32xbf16>
    %36 = vector.extract_strided_slice %15 {offsets = [0, 0], sizes = [32, 128], strides = [1, 1]} : vector<128x128xbf16> to vector<32x128xbf16>
    %cst_14 = arith.constant dense<0.000000e+00> : vector<16x128xf32>
    %37 = tpu.matmul %35, %36, %cst_14 {dimension_numbers = #tpu.dot_dimension_numbers<[1], [0], [0], [1], [0, 0, 1, 1], [], []>} : vector<16x32xbf16>, vector<32x128xbf16>, vector<16x128xf32> -> vector<16x128xf32>
    %38 = arith.addf %17, %37 : vector<16x128xf32>
    %39 = vector.extract_strided_slice %9 {offsets = [0, 32], sizes = [16, 32], strides = [1, 1]} : vector<16x128xbf16> to vector<16x32xbf16>
    %40 = vector.extract_strided_slice %11 {offsets = [0, 32], sizes = [16, 32], strides = [1, 1]} : vector<16x128xbf16> to vector<16x32xbf16>
    %cst_15 = arith.constant dense<0.000000e+00> : vector<16x16xf32>
    %41 = tpu.matmul %39, %40, %cst_15 {dimension_numbers = #tpu.dot_dimension_numbers<[1], [1], [0], [0], [0, 0, 1, 0], [], []>} : vector<16x32xbf16>, vector<16x32xbf16>, vector<16x16xf32> -> vector<16x16xf32>
    %42 = arith.addf %41, %16 : vector<16x16xf32>
    %cst_16 = arith.constant dense<0xFF800000> : vector<16xf32>
    %43 = vector.multi_reduction <maximumf>, %42, %cst_16 [1] : vector<16x16xf32> to vector<16xf32>
    %44 = vector.shape_cast %43 : vector<16xf32> to vector<16x1xf32>
    %45 = vector.broadcast %44 : vector<16x1xf32> to vector<16x16xf32>
    %46 = arith.subf %42, %45 : vector<16x16xf32>
    %47 = math.exp %46 : vector<16x16xf32>
    %cst_17 = arith.constant dense<0.000000e+00> : vector<16xf32>
    %48 = vector.multi_reduction <add>, %47, %cst_17 [1] : vector<16x16xf32> to vector<16xf32>
    %49 = vector.shape_cast %48 : vector<16xf32> to vector<16x1xf32>
    %50 = tpu.reciprocal %49 {approx = true} : vector<16x1xf32> -> vector<16x1xf32>
    %51 = vector.broadcast %50 : vector<16x1xf32> to vector<16x16xf32>
    %52 = arith.mulf %47, %51 : vector<16x16xf32>
    %53 = arith.truncf %52 : vector<16x16xf32> to vector<16x16xbf16>
    %54 = vector.extract_strided_slice %13 {offsets = [0, 32], sizes = [16, 32], strides = [1, 1]} : vector<16x128xbf16> to vector<16x32xbf16>
    %cst_18 = arith.constant dense<0.000000e+00> : vector<16x32xf32>
    %55 = tpu.matmul %53, %54, %cst_18 {dimension_numbers = #tpu.dot_dimension_numbers<[1], [0], [0], [1], [0, 0, 1, 1], [], []>} : vector<16x16xbf16>, vector<16x32xbf16>, vector<16x32xf32> -> vector<16x32xf32>
    %56 = arith.truncf %55 : vector<16x32xf32> to vector<16x32xbf16>
    %57 = vector.extract_strided_slice %15 {offsets = [32, 0], sizes = [32, 128], strides = [1, 1]} : vector<128x128xbf16> to vector<32x128xbf16>
    %cst_19 = arith.constant dense<0.000000e+00> : vector<16x128xf32>
    %58 = tpu.matmul %56, %57, %cst_19 {dimension_numbers = #tpu.dot_dimension_numbers<[1], [0], [0], [1], [0, 0, 1, 1], [], []>} : vector<16x32xbf16>, vector<32x128xbf16>, vector<16x128xf32> -> vector<16x128xf32>
    %59 = arith.addf %38, %58 : vector<16x128xf32>
    %60 = vector.extract_strided_slice %9 {offsets = [0, 64], sizes = [16, 32], strides = [1, 1]} : vector<16x128xbf16> to vector<16x32xbf16>
    %61 = vector.extract_strided_slice %11 {offsets = [0, 64], sizes = [16, 32], strides = [1, 1]} : vector<16x128xbf16> to vector<16x32xbf16>
    %cst_20 = arith.constant dense<0.000000e+00> : vector<16x16xf32>
    %62 = tpu.matmul %60, %61, %cst_20 {dimension_numbers = #tpu.dot_dimension_numbers<[1], [1], [0], [0], [0, 0, 1, 0], [], []>} : vector<16x32xbf16>, vector<16x32xbf16>, vector<16x16xf32> -> vector<16x16xf32>
    %63 = arith.addf %62, %16 : vector<16x16xf32>
    %cst_21 = arith.constant dense<0xFF800000> : vector<16xf32>
    %64 = vector.multi_reduction <maximumf>, %63, %cst_21 [1] : vector<16x16xf32> to vector<16xf32>
    %65 = vector.shape_cast %64 : vector<16xf32> to vector<16x1xf32>
    %66 = vector.broadcast %65 : vector<16x1xf32> to vector<16x16xf32>
    %67 = arith.subf %63, %66 : vector<16x16xf32>
    %68 = math.exp %67 : vector<16x16xf32>
    %cst_22 = arith.constant dense<0.000000e+00> : vector<16xf32>
    %69 = vector.multi_reduction <add>, %68, %cst_22 [1] : vector<16x16xf32> to vector<16xf32>
    %70 = vector.shape_cast %69 : vector<16xf32> to vector<16x1xf32>
    %71 = tpu.reciprocal %70 {approx = true} : vector<16x1xf32> -> vector<16x1xf32>
    %72 = vector.broadcast %71 : vector<16x1xf32> to vector<16x16xf32>
    %73 = arith.mulf %68, %72 : vector<16x16xf32>
    %74 = arith.truncf %73 : vector<16x16xf32> to vector<16x16xbf16>
    %75 = vector.extract_strided_slice %13 {offsets = [0, 64], sizes = [16, 32], strides = [1, 1]} : vector<16x128xbf16> to vector<16x32xbf16>
    %cst_23 = arith.constant dense<0.000000e+00> : vector<16x32xf32>
    %76 = tpu.matmul %74, %75, %cst_23 {dimension_numbers = #tpu.dot_dimension_numbers<[1], [0], [0], [1], [0, 0, 1, 1], [], []>} : vector<16x16xbf16>, vector<16x32xbf16>, vector<16x32xf32> -> vector<16x32xf32>
    %77 = arith.truncf %76 : vector<16x32xf32> to vector<16x32xbf16>
    %78 = vector.extract_strided_slice %15 {offsets = [64, 0], sizes = [32, 128], strides = [1, 1]} : vector<128x128xbf16> to vector<32x128xbf16>
    %cst_24 = arith.constant dense<0.000000e+00> : vector<16x128xf32>
    %79 = tpu.matmul %77, %78, %cst_24 {dimension_numbers = #tpu.dot_dimension_numbers<[1], [0], [0], [1], [0, 0, 1, 1], [], []>} : vector<16x32xbf16>, vector<32x128xbf16>, vector<16x128xf32> -> vector<16x128xf32>
    %80 = arith.addf %59, %79 : vector<16x128xf32>
    %81 = vector.extract_strided_slice %9 {offsets = [0, 96], sizes = [16, 32], strides = [1, 1]} : vector<16x128xbf16> to vector<16x32xbf16>
    %82 = vector.extract_strided_slice %11 {offsets = [0, 96], sizes = [16, 32], strides = [1, 1]} : vector<16x128xbf16> to vector<16x32xbf16>
    %cst_25 = arith.constant dense<0.000000e+00> : vector<16x16xf32>
    %83 = tpu.matmul %81, %82, %cst_25 {dimension_numbers = #tpu.dot_dimension_numbers<[1], [1], [0], [0], [0, 0, 1, 0], [], []>} : vector<16x32xbf16>, vector<16x32xbf16>, vector<16x16xf32> -> vector<16x16xf32>
    %84 = arith.addf %83, %16 : vector<16x16xf32>
    %cst_26 = arith.constant dense<0xFF800000> : vector<16xf32>
    %85 = vector.multi_reduction <maximumf>, %84, %cst_26 [1] : vector<16x16xf32> to vector<16xf32>
    %86 = vector.shape_cast %85 : vector<16xf32> to vector<16x1xf32>
    %87 = vector.broadcast %86 : vector<16x1xf32> to vector<16x16xf32>
    %88 = arith.subf %84, %87 : vector<16x16xf32>
    %89 = math.exp %88 : vector<16x16xf32>
    %cst_27 = arith.constant dense<0.000000e+00> : vector<16xf32>
    %90 = vector.multi_reduction <add>, %89, %cst_27 [1] : vector<16x16xf32> to vector<16xf32>
    %91 = vector.shape_cast %90 : vector<16xf32> to vector<16x1xf32>
    %92 = tpu.reciprocal %91 {approx = true} : vector<16x1xf32> -> vector<16x1xf32>
    %93 = vector.broadcast %92 : vector<16x1xf32> to vector<16x16xf32>
    %94 = arith.mulf %89, %93 : vector<16x16xf32>
    %95 = arith.truncf %94 : vector<16x16xf32> to vector<16x16xbf16>
    %96 = vector.extract_strided_slice %13 {offsets = [0, 96], sizes = [16, 32], strides = [1, 1]} : vector<16x128xbf16> to vector<16x32xbf16>
    %cst_28 = arith.constant dense<0.000000e+00> : vector<16x32xf32>
    %97 = tpu.matmul %95, %96, %cst_28 {dimension_numbers = #tpu.dot_dimension_numbers<[1], [0], [0], [1], [0, 0, 1, 1], [], []>} : vector<16x16xbf16>, vector<16x32xbf16>, vector<16x32xf32> -> vector<16x32xf32>
    %98 = arith.truncf %97 : vector<16x32xf32> to vector<16x32xbf16>
    %99 = vector.extract_strided_slice %15 {offsets = [96, 0], sizes = [32, 128], strides = [1, 1]} : vector<128x128xbf16> to vector<32x128xbf16>
    %cst_29 = arith.constant dense<0.000000e+00> : vector<16x128xf32>
    %100 = tpu.matmul %98, %99, %cst_29 {dimension_numbers = #tpu.dot_dimension_numbers<[1], [0], [0], [1], [0, 0, 1, 1], [], []>} : vector<16x32xbf16>, vector<32x128xbf16>, vector<16x128xf32> -> vector<16x128xf32>
    %101 = arith.addf %80, %100 : vector<16x128xf32>
    %c0_30 = arith.constant 0 : index
    %c0_31 = arith.constant 0 : index
    %102 = vector.load %arg5[%c0_30, %c0_31] : memref<1x128xf32, #tpu.memory_space<vmem>>, vector<1x128xf32>
    %103 = vector.broadcast %102 : vector<1x128xf32> to vector<16x128xf32>
    %104 = arith.addf %101, %103 : vector<16x128xf32>
    %105 = arith.addf %7, %104 : vector<16x128xf32>
    %cst_32 = arith.constant dense<0.000000e+00> : vector<16xf32>
    %106 = vector.multi_reduction <add>, %105, %cst_32 [1] : vector<16x128xf32> to vector<16xf32>
    %107 = vector.shape_cast %106 : vector<16xf32> to vector<16x1xf32>
    %cst_33 = arith.constant 1.280000e+02 : f32
    %108 = vector.broadcast %cst_33 : f32 to vector<16x1xf32>
    %109 = arith.divf %107, %108 : vector<16x1xf32>
    %110 = vector.broadcast %109 : vector<16x1xf32> to vector<16x128xf32>
    %111 = arith.subf %105, %110 : vector<16x128xf32>
    %112 = arith.mulf %111, %111 : vector<16x128xf32>
    %cst_34 = arith.constant dense<0.000000e+00> : vector<16xf32>
    %113 = vector.multi_reduction <add>, %112, %cst_34 [1] : vector<16x128xf32> to vector<16xf32>
    %114 = vector.shape_cast %113 : vector<16xf32> to vector<16x1xf32>
    %cst_35 = arith.constant 1.280000e+02 : f32
    %115 = vector.broadcast %cst_35 : f32 to vector<16x1xf32>
    %116 = arith.divf %114, %115 : vector<16x1xf32>
    %117 = vector.broadcast %109 : vector<16x1xf32> to vector<16x128xf32>
    %118 = arith.subf %105, %117 : vector<16x128xf32>
    %cst_36 = arith.constant 9.99999974E-6 : f32
    %119 = vector.broadcast %cst_36 : f32 to vector<16x1xf32>
    %120 = arith.addf %116, %119 : vector<16x1xf32>
    %121 = math.rsqrt %120 : vector<16x1xf32>
    %122 = vector.broadcast %121 : vector<16x1xf32> to vector<16x128xf32>
    %123 = arith.mulf %118, %122 : vector<16x128xf32>
    %c0_37 = arith.constant 0 : index
    %c0_38 = arith.constant 0 : index
    %124 = vector.load %arg6[%c0_37, %c0_38] : memref<1x128xf32, #tpu.memory_space<vmem>>, vector<1x128xf32>
    %125 = vector.broadcast %124 : vector<1x128xf32> to vector<16x128xf32>
    %126 = arith.mulf %123, %125 : vector<16x128xf32>
    %c0_39 = arith.constant 0 : index
    %c0_40 = arith.constant 0 : index
    %127 = vector.load %arg7[%c0_39, %c0_40] : memref<1x128xf32, #tpu.memory_space<vmem>>, vector<1x128xf32>
    %128 = vector.broadcast %127 : vector<1x128xf32> to vector<16x128xf32>
    %129 = arith.addf %126, %128 : vector<16x128xf32>
    %130 = arith.truncf %129 : vector<16x128xf32> to vector<16x128xbf16>
    %c0_41 = arith.constant 0 : index
    %c0_42 = arith.constant 0 : index
    %131 = vector.load %arg8[%c0_41, %c0_42] : memref<128x256xbf16, #tpu.memory_space<vmem>>, vector<128x256xbf16>
    %cst_43 = arith.constant dense<0.000000e+00> : vector<16x256xf32>
    %132 = tpu.matmul %130, %131, %cst_43 {dimension_numbers = #tpu.dot_dimension_numbers<[1], [0], [0], [1], [0, 0, 1, 1], [], []>} : vector<16x128xbf16>, vector<128x256xbf16>, vector<16x256xf32> -> vector<16x256xf32>
    %133 = vector.extract_strided_slice %132 {offsets = [0, 0], sizes = [16, 128], strides = [1, 1]} : vector<16x256xf32> to vector<16x128xf32>
    %134 = vector.extract_strided_slice %132 {offsets = [0, 128], sizes = [16, 10], strides = [1, 1]} : vector<16x256xf32> to vector<16x10xf32>
    %c0_44 = arith.constant 0 : index
    %c0_45 = arith.constant 0 : index
    %135 = memref.load %arg9[%c0_44, %c0_45] : memref<1x1xf32, #tpu.memory_space<smem>>
    %136 = vector.extract_strided_slice %133 {offsets = [0, 0], sizes = [8, 128], strides = [1, 1]} : vector<16x128xf32> to vector<8x128xf32>
    %137 = arith.truncf %136 : vector<8x128xf32> to vector<8x128xbf16>
    %138 = vector.extract_strided_slice %129 {offsets = [0, 0], sizes = [8, 128], strides = [1, 1]} : vector<16x128xf32> to vector<8x128xf32>
    %139 = arith.truncf %138 : vector<8x128xf32> to vector<8x128xbf16>
    %cst_46 = arith.constant dense<0.000000e+00> : vector<8x8xf32>
    %140 = tpu.matmul %137, %139, %cst_46 {dimension_numbers = #tpu.dot_dimension_numbers<[1], [1], [0], [0], [0, 0, 1, 0], [], []>} : vector<8x128xbf16>, vector<8x128xbf16>, vector<8x8xf32> -> vector<8x8xf32>
    %141 = vector.broadcast %135 : f32 to vector<8x8xf32>
    %142 = arith.addf %140, %141 : vector<8x8xf32>
    %143 = vector.extract_strided_slice %133 {offsets = [8, 0], sizes = [8, 128], strides = [1, 1]} : vector<16x128xf32> to vector<8x128xf32>
    %144 = arith.truncf %143 : vector<8x128xf32> to vector<8x128xbf16>
    %145 = vector.extract_strided_slice %129 {offsets = [8, 0], sizes = [8, 128], strides = [1, 1]} : vector<16x128xf32> to vector<8x128xf32>
    %146 = arith.truncf %145 : vector<8x128xf32> to vector<8x128xbf16>
    %cst_47 = arith.constant dense<0.000000e+00> : vector<8x8xf32>
    %147 = tpu.matmul %144, %146, %cst_47 {dimension_numbers = #tpu.dot_dimension_numbers<[1], [1], [0], [0], [0, 0, 1, 0], [], []>} : vector<8x128xbf16>, vector<8x128xbf16>, vector<8x8xf32> -> vector<8x8xf32>
    %148 = vector.broadcast %135 : f32 to vector<8x8xf32>
    %149 = arith.addf %147, %148 : vector<8x8xf32>
    %150 = tpu.concatenate %142, %149 in 0 : vector<8x8xf32>, vector<8x8xf32> -> vector<16x8xf32>
    %cst_48 = arith.constant 0.000000e+00 : f32
    %151 = vector.broadcast %cst_48 : f32 to vector<16x62xf32>
    %152 = tpu.concatenate %14, %150, %134, %151 in 1 : vector<16x48xf32>, vector<16x8xf32>, vector<16x10xf32>, vector<16x62xf32> -> vector<16x128xf32>
    %c0_49 = arith.constant 0 : index
    %c0_50 = arith.constant 0 : index
    %153 = vector.load %arg10[%c0_49, %c0_50] : memref<16x128xf32, #tpu.memory_space<vmem>>, vector<16x128xf32>
    tpu.vector_store %arg10[%c0_49, %c0_50], %152 {strides = array<i32>} : memref<16x128xf32, #tpu.memory_space<vmem>>, vector<16x128xf32>,
    return
  }
}

</mosaic_0001>

<llo_original>
// kernel: multi_task_forward.1
$region0: #{multi_task_forward.1}
  #allocation0 [shape = 'u32[]', space=smem, size = 0x4, offset = 0x4, fixed_abs, tag = 'smem constant byte address 0x4 - core index']
  #allocation1 [shape = 'u32[144,128]{1,0:T(1,128)}', space=vmem, size = 0x12000, scoped, tag = 'internal scratch']
  #allocation2 [shape = 'f32[1,1]{1,0:T(1,128)S(6)}', space=smem, size = 0x200, scoped, tag = 'scoped memory for multi_task_forward.1']
  %s0 = inlined_call_operand.vmem [shape: f32[16,64], index: 0, kind: input, shape index: {}]
  %s1 = inlined_call_operand.vmem [shape: bf16[64,640], index: 1, kind: input, shape index: {}]
  %s2 = inlined_call_operand.vmem [shape: f32[1,640], index: 2, kind: input, shape index: {}]
  %s3 = inlined_call_operand.vmem [shape: f32[16,16], index: 3, kind: input, shape index: {}]
  %s4 = inlined_call_operand.hbm [shape: bf16[128,128], index: 4, kind: input, shape index: {}]
  %s5 = inlined_call_operand.vmem [shape: f32[1,128], index: 5, kind: input, shape index: {}]
  %s6 = inlined_call_operand.vmem [shape: f32[1,128], index: 6, kind: input, shape index: {}]
  %s7 = inlined_call_operand.vmem [shape: f32[1,128], index: 7, kind: input, shape index: {}]
  %s8 = inlined_call_operand.hbm [shape: bf16[128,256], index: 8, kind: input, shape index: {}]
  %s9 = inlined_call_operand.<no memory space> [shape: f32[1,1], index: 9, kind: input, shape index: {}]
  %s10 = inlined_call_operand.vmem [shape: f32[16,128], index: 10, kind: output, shape index: {}]
  %s11 = sld [smem:[#allocation0]]
  $region58: #{multi_task_forward.1} parent=0
    _
  %s13 = ssub.s32 1, %s11
  %s14 = scalar_select 0, %s13, %s11
  %15 = sst [smem:[#allocation2]] %s9
  $region1: #{multi_task_forward.1} parent=0
    #allocation3 [shape = 'u8[32768]{0}', space=vmem, size = 0x8000, scoped, tag = 'input window, operand 4, single buffered']
    #allocation4 [shape = 's32[1]{0}', space=sflag, size = 0x4, scoped, tag = 'scoped memory for multi_task_forward.1']
    #allocation5 [shape = 'u8[65536]{0}', space=vmem, size = 0x10000, scoped, tag = 'input window, operand 8, single buffered']
    #allocation6 [shape = 's32[1]{0}', space=sflag, size = 0x4, scoped, tag = 'scoped memory for multi_task_forward.1']
    %16 = vsyncpa [#allocation4], 0
    %17 = vsyncpa [#allocation6], 0
    // Predicated region
    $region2: #{multi_task_forward.1} parent=1 // pred_check
      _
    $region3: #{multi_task_forward.1} parent=1 // pred_check_branch
      %19 = sbr.rel (0) target = $region5
    $region4: #{multi_task_forward.1} parent=1 // pred_region
      _
    $region5: #{multi_task_forward.1} parent=1 // pred_fallthru
      _
    // Predicated region
    $region6: #{multi_task_forward.1} parent=1 // pred_check
      _
    $region7: #{multi_task_forward.1} parent=1 // pred_check_branch
      %21 = sbr.rel (0) target = $region9
    $region8: #{multi_task_forward.1} parent=1 // pred_region
      _
    $region9: #{multi_task_forward.1} parent=1 // pred_fallthru
      _
    // Predicated region
    $region10: #{multi_task_forward.1} parent=1 // pred_check
      _
    $region11: #{multi_task_forward.1} parent=1 // pred_check_branch
      %23 = sbr.rel (0) target = $region13
    $region12: #{multi_task_forward.1} parent=1 // pred_region
      _
    $region13: #{multi_task_forward.1} parent=1 // pred_fallthru
      _
    // Predicated region
    $region14: #{multi_task_forward.1} parent=1 // pred_check
      _
    $region15: #{multi_task_forward.1} parent=1 // pred_check_branch
      %25 = sbr.rel (0) target = $region17
    $region16: #{multi_task_forward.1} parent=1 // pred_region
      _
    $region17: #{multi_task_forward.1} parent=1 // pred_fallthru
      _
    // Predicated region
    $region18: #{multi_task_forward.1} parent=1 // pred_check
      _
    $region19: #{multi_task_forward.1} parent=1 // pred_check_branch
      %27 = sbr.rel (0) target = $region21
    $region20: #{multi_task_forward.1} parent=1 // pred_region
      %s29 = ssub.s32 1024, 1024
      %30 = vsyncadd [#allocation4], %s29
      %s31 = sshll.u32 [#allocation3], 4
      %s32 = int_to_ptr.vmem [resolvable:$true] %s31
      %37 = dma.hbm_to_vmem [thread:$0]  %s4, 1024, %s32, [#allocation4], 64, 64, 4
    $region21: #{multi_task_forward.1} parent=1 // pred_fallthru
      _
    // Predicated region
    $region22: #{multi_task_forward.1} parent=1 // pred_check
      _
    $region23: #{multi_task_forward.1} parent=1 // pred_check_branch
      %39 = sbr.rel (0) target = $region25
    $region24: #{multi_task_forward.1} parent=1 // pred_region
      _
    $region25: #{multi_task_forward.1} parent=1 // pred_fallthru
      _
    // Predicated region
    $region26: #{multi_task_forward.1} parent=1 // pred_check
      _
    $region27: #{multi_task_forward.1} parent=1 // pred_check_branch
      %41 = sbr.rel (0) target = $region29
    $region28: #{multi_task_forward.1} parent=1 // pred_region
      _
    $region29: #{multi_task_forward.1} parent=1 // pred_fallthru
      _
    // Predicated region
    $region30: #{multi_task_forward.1} parent=1 // pred_check
      _
    $region31: #{multi_task_forward.1} parent=1 // pred_check_branch
      %43 = sbr.rel (0) target = $region33
    $region32: #{multi_task_forward.1} parent=1 // pred_region
      _
    $region33: #{multi_task_forward.1} parent=1 // pred_fallthru
      _
    // Predicated region
    $region34: #{multi_task_forward.1} parent=1 // pred_check
      _
    $region35: #{multi_task_forward.1} parent=1 // pred_check_branch
      %45 = sbr.rel (0) target = $region37
    $region36: #{multi_task_forward.1} parent=1 // pred_region
      %s47 = ssub.s32 2048, 2048
      %48 = vsyncadd [#allocation6], %s47
      %s49 = sshll.u32 [#allocation5], 4
      %s50 = int_to_ptr.vmem [resolvable:$true] %s49
      %55 = dma.hbm_to_vmem [thread:$0]  %s8, 2048, %s50, [#allocation6], 128, 128, 8
    $region37: #{multi_task_forward.1} parent=1 // pred_fallthru
      _
    // Predicated region
    $region38: #{multi_task_forward.1} parent=1 // pred_check
      _
    $region39: #{multi_task_forward.1} parent=1 // pred_check_branch
      %57 = sbr.rel (0) target = $region41
    $region40: #{multi_task_forward.1} parent=1 // pred_region
      _
    $region41: #{multi_task_forward.1} parent=1 // pred_fallthru
      _
    // Predicated region
    $region42: #{multi_task_forward.1} parent=1 // pred_check
      _
    $region43: #{multi_task_forward.1} parent=1 // pred_check_branch
      %59 = sbr.rel (0) target = $region45
    $region44: #{multi_task_forward.1} parent=1 // pred_region
      %60 = dma.done [#allocation4], 1024
    $region45: #{multi_task_forward.1} parent=1 // pred_fallthru
      _
    // Predicated region
    $region46: #{multi_task_forward.1} parent=1 // pred_check
      _
    $region47: #{multi_task_forward.1} parent=1 // pred_check_branch
      %62 = sbr.rel (0) target = $region49
    $region48: #{multi_task_forward.1} parent=1 // pred_region
      %63 = dma.done [#allocation6], 2048
    $region49: #{multi_task_forward.1} parent=1 // pred_fallthru
      _
    %v65 = vld [vmem:[%s0] sm:$0xff]
    %v66 = vld [vmem:[%s0 + $0x8] sm:$0xff]
    %v67 = vpack.c.bf16 %v66, %v65
    %v68 = vld [vmem:[%s1] sm:$0xff]
    %v69 = vld [vmem:[%s1 + $0x8] sm:$0xff]
    %v70 = vld [vmem:[%s1 + $0x10] sm:$0xf]
    %v71 = vld [vmem:[%s1 + $0x14] sm:$0xff]
    %v72 = vld [vmem:[%s1 + $0x1c] sm:$0xff]
    %v73 = vld [vmem:[%s1 + $0x24] sm:$0xf]
    %v74 = vld [vmem:[%s1 + $0x28] sm:$0xff]
    %v75 = vld [vmem:[%s1 + $0x30] sm:$0xff]
    %v76 = vld [vmem:[%s1 + $0x38] sm:$0xf]
    %v77 = vld [vmem:[%s1 + $0x3c] sm:$0xff]
    %v78 = vld [vmem:[%s1 + $0x44] sm:$0xff]
    %v79 = vld [vmem:[%s1 + $0x4c] sm:$0xf]
    %v80 = vld [vmem:[%s1 + $0x50] sm:$0xff]
    %v81 = vld [vmem:[%s1 + $0x58] sm:$0xff]
    %v82 = vld [vmem:[%s1 + $0x60] sm:$0xf]
    %v83 = vld [vmem:[%s1 + $0x64] sm:$0xff]
    %v84 = vld [vmem:[%s1 + $0x6c] sm:$0xff]
    %v85 = vld [vmem:[%s1 + $0x74] sm:$0xf]
    %v86 = vld [vmem:[%s1 + $0x78] sm:$0xff]
    %v87 = vld [vmem:[%s1 + $0x80] sm:$0xff]
    %v88 = vld [vmem:[%s1 + $0x88] sm:$0xf]
    %v89 = vld [vmem:[%s1 + $0x8c] sm:$0xff]
    %v90 = vld [vmem:[%s1 + $0x94] sm:$0xff]
    %v91 = vld [vmem:[%s1 + $0x9c] sm:$0xf]
    %v92 = vld [vmem:[%s2] sm:$0x1f]
    %v94 = vlaneseq
    %v95 = vshrl.u32 %v94, 7
    %v96 = vsub.s32 0, %v95
    %v97 = vrot.slane %v92, %v96
    %v98 = vlaneseq
    %v99 = vshrl.u32 %v98, 7
    %v100 = vsub.s32 1, %v99
    %v101 = vrot.slane %v92, %v100
    %v102 = vlaneseq
    %v103 = vshrl.u32 %v102, 7
    %v104 = vsub.s32 2, %v103
    %v105 = vrot.slane %v92, %v104
    %v106 = vlaneseq
    %v107 = vshrl.u32 %v106, 7
    %v108 = vsub.s32 3, %v107
    %v109 = vrot.slane %v92, %v108
    %v110 = vlaneseq
    %v111 = vshrl.u32 %v110, 7
    %v112 = vsub.s32 4, %v111
    %v113 = vrot.slane %v92, %v112
    %v143 = vunpack.c.l.b16 %v68
    %v144 = vunpack.c.h.b16 %v68
    %v145 = vunpack.c.l.b16 %v69
    %v146 = vunpack.c.h.b16 %v69
    %v147 = vunpack.c.l.b16 %v70
    %v148 = vunpack.c.l.b16 %v71
    %v149 = vunpack.c.h.b16 %v71
    %v150 = vunpack.c.l.b16 %v72
    %v151 = vunpack.c.h.b16 %v72
    %v152 = vunpack.c.l.b16 %v73
    %v153 = vunpack.c.l.b16 %v74
    %v154 = vunpack.c.h.b16 %v74
    %v155 = vunpack.c.l.b16 %v75
    %v156 = vunpack.c.h.b16 %v75
    %v157 = vunpack.c.l.b16 %v76
    %v158 = vunpack.c.l.b16 %v77
    %v159 = vunpack.c.h.b16 %v77
    %v160 = vunpack.c.l.b16 %v78
    %v161 = vunpack.c.h.b16 %v78
    %v162 = vunpack.c.l.b16 %v79
    %v163 = vunpack.c.l.b16 %v80
    %v164 = vunpack.c.h.b16 %v80
    %v165 = vunpack.c.l.b16 %v81
    %v166 = vunpack.c.h.b16 %v81
    %v167 = vunpack.c.l.b16 %v82
    %v168 = vunpack.c.l.b16 %v83
    %v169 = vunpack.c.h.b16 %v83
    %v170 = vunpack.c.l.b16 %v84
    %v171 = vunpack.c.h.b16 %v84
    %v172 = vunpack.c.l.b16 %v85
    %v173 = vunpack.c.l.b16 %v86
    %v174 = vunpack.c.h.b16 %v86
    %v175 = vunpack.c.l.b16 %v87
    %v176 = vunpack.c.h.b16 %v87
    %v177 = vunpack.c.l.b16 %v88
    %v178 = vunpack.c.l.b16 %v89
    %v179 = vunpack.c.h.b16 %v89
    %v180 = vunpack.c.l.b16 %v90
    %v181 = vunpack.c.h.b16 %v90
    %v182 = vunpack.c.l.b16 %v91
    %v183 = vpack.c.b16 %v148, %v143
    %v184 = vpack.c.b16 %v149, %v144
    %v185 = vpack.c.b16 %v150, %v145
    %v186 = vpack.c.b16 %v151, %v146
    %v187 = vpack.c.b16 %v152, %v147
    %v188 = vpack.c.b16 %v158, %v153
    %v189 = vpack.c.b16 %v159, %v154
    %v190 = vpack.c.b16 %v160, %v155
    %v191 = vpack.c.b16 %v161, %v156
    %v192 = vpack.c.b16 %v162, %v157
    %v193 = vpack.c.b16 %v168, %v163
    %v194 = vpack.c.b16 %v169, %v164
    %v195 = vpack.c.b16 %v170, %v165
    %v196 = vpack.c.b16 %v171, %v166
    %v197 = vpack.c.b16 %v172, %v167
    %v198 = vpack.c.b16 %v178, %v173
    %v199 = vpack.c.b16 %v179, %v174
    %v200 = vpack.c.b16 %v180, %v175
    %v201 = vpack.c.b16 %v181, %v176
    %v202 = vpack.c.b16 %v182, %v177
    %vm223 = vcmask 523264
    %v225 = vsel %vm223, %v67, 0
    %227 = vmatprep.subr.bf16.mxu0 %v184
    %228 = vmatpush1.bf16.msra.mxu0 %v183
    %229 = vmatprep.subr.bf16.mxu0 %v189
    %230 = vmatpush1.bf16.msra.mxu0 %v188
    %231 = vmatprep.subr.bf16.mxu0 %v194
    %232 = vmatpush1.bf16.msra.mxu0 %v193
    %233 = vmatprep.subr.bf16.mxu0 %v199
    %234 = vmatpush1.bf16.msra.mxu0 %v198
    %235 = vmatprep.subr.bf16.mxu0 0
    %236 = vmatpush1.bf16.msra.mxu0 0
    %237 = vmatprep.subr.bf16.mxu0 0
    %238 = vmatpush1.bf16.msra.mxu0 0
    %239 = vmatprep.subr.bf16.mxu0 0
    %240 = vmatpush1.bf16.msra.mxu0 0
    %241 = vmatprep.subr.bf16.mxu0 0
    %242 = vmatpush1.bf16.msra.mxu0 0
    %243 = vmatprep.subr.bf16.mxu0 0
    %244 = vmatpush1.bf16.msra.mxu0 0
    %245 = vmatprep.subr.bf16.mxu0 0
    %246 = vmatpush1.bf16.msra.mxu0 0
    %247 = vmatprep.subr.bf16.mxu0 0
    %248 = vmatpush1.bf16.msra.mxu0 0
    %249 = vmatprep.subr.bf16.mxu0 0
    %250 = vmatpush1.bf16.msra.mxu0 0
    %251 = vmatprep.subr.bf16.mxu0 0
    %252 = vmatpush1.bf16.msra.mxu0 0
    %253 = vmatprep.subr.bf16.mxu0 0
    %254 = vmatpush1.bf16.msra.mxu0 0
    %255 = vmatprep.subr.bf16.mxu0 0
    %256 = vmatpush1.bf16.msra.mxu0 0
    %257 = vmatprep.subr.bf16.mxu0 0
    %258 = vmatpush1.bf16.msra.mxu0 0
    %259 = vmatprep.mubr.bf16.mxu0 0
    %260 = vmatmul.mubr.bf16.gmra.mrb[0].mxu0 %v225
    %v261 = vpop.f32.mrb[0].mxu0
    %v262 = vadd.f32 %v97, %v261
    %v263 = vpop.f32.mrb[0].mxu0
    %v264 = vadd.f32 %v101, %v263
    %v265 = vpop.f32.mrb[0].mxu0
    %v266 = vadd.f32 %v97, %v265
    %v267 = vpop.f32.mrb[0].mxu0
    %v268 = vadd.f32 %v101, %v267
    %269 = vdwg.mxu0
    %270 = vmatprep.subr.bf16.mxu0 %v186
    %271 = vmatpush1.bf16.msra.mxu0 %v185
    %272 = vmatprep.subr.bf16.mxu0 %v191
    %273 = vmatpush1.bf16.msra.mxu0 %v190
    %274 = vmatprep.subr.bf16.mxu0 %v196
    %275 = vmatpush1.bf16.msra.mxu0 %v195
    %276 = vmatprep.subr.bf16.mxu0 %v201
    %277 = vmatpush1.bf16.msra.mxu0 %v200
    %278 = vmatprep.subr.bf16.mxu0 0
    %279 = vmatpush1.bf16.msra.mxu0 0
    %280 = vmatprep.subr.bf16.mxu0 0
    %281 = vmatpush1.bf16.msra.mxu0 0
    %282 = vmatprep.subr.bf16.mxu0 0
    %283 = vmatpush1.bf16.msra.mxu0 0
    %284 = vmatprep.subr.bf16.mxu0 0
    %285 = vmatpush1.bf16.msra.mxu0 0
    %286 = vmatprep.subr.bf16.mxu0 0
    %287 = vmatpush1.bf16.msra.mxu0 0
    %288 = vmatprep.subr.bf16.mxu0 0
    %289 = vmatpush1.bf16.msra.mxu0 0
    %290 = vmatprep.subr.bf16.mxu0 0
    %291 = vmatpush1.bf16.msra.mxu0 0
    %292 = vmatprep.subr.bf16.mxu0 0
    %293 = vmatpush1.bf16.msra.mxu0 0
    %294 = vmatprep.subr.bf16.mxu0 0
    %295 = vmatpush1.bf16.msra.mxu0 0
    %296 = vmatprep.subr.bf16.mxu0 0
    %297 = vmatpush1.bf16.msra.mxu0 0
    %298 = vmatprep.subr.bf16.mxu0 0
    %299 = vmatpush1.bf16.msra.mxu0 0
    %300 = vmatprep.subr.bf16.mxu0 0
    %301 = vmatpush1.bf16.msra.mxu0 0
    %302 = vmatprep.mubr.bf16.mxu0 0
    %303 = vmatmul.mubr.bf16.gmra.mrb[0].mxu0 %v225
    %v304 = vpop.f32.mrb[0].mxu0
    %v305 = vadd.f32 %v105, %v304
    %v306 = vpop.f32.mrb[0].mxu0
    %v307 = vadd.f32 %v109, %v306
    %v308 = vpop.f32.mrb[0].mxu0
    %v309 = vadd.f32 %v105, %v308
    %v310 = vpop.f32.mrb[0].mxu0
    %v311 = vadd.f32 %v109, %v310
    %312 = vdwg.mxu0
    %313 = vmatprep.subr.bf16.mxu0 0
    %314 = vmatpush1.bf16.msra.mxu0 %v187
    %315 = vmatprep.subr.bf16.mxu0 0
    %316 = vmatpush1.bf16.msra.mxu0 %v192
    %317 = vmatprep.subr.bf16.mxu0 0
    %318 = vmatpush1.bf16.msra.mxu0 %v197
    %319 = vmatprep.subr.bf16.mxu0 0
    %320 = vmatpush1.bf16.msra.mxu0 %v202
    %321 = vmatprep.subr.bf16.mxu0 0
    %322 = vmatpush1.bf16.msra.mxu0 0
    %323 = vmatprep.subr.bf16.mxu0 0
    %324 = vmatpush1.bf16.msra.mxu0 0
    %325 = vmatprep.subr.bf16.mxu0 0
    %326 = vmatpush1.bf16.msra.mxu0 0
    %327 = vmatprep.subr.bf16.mxu0 0
    %328 = vmatpush1.bf16.msra.mxu0 0
    %329 = vmatprep.subr.bf16.mxu0 0
    %330 = vmatpush1.bf16.msra.mxu0 0
    %331 = vmatprep.subr.bf16.mxu0 0
    %332 = vmatpush1.bf16.msra.mxu0 0
    %333 = vmatprep.subr.bf16.mxu0 0
    %334 = vmatpush1.bf16.msra.mxu0 0
    %335 = vmatprep.subr.bf16.mxu0 0
    %336 = vmatpush1.bf16.msra.mxu0 0
    %337 = vmatprep.subr.bf16.mxu0 0
    %338 = vmatpush1.bf16.msra.mxu0 0
    %339 = vmatprep.subr.bf16.mxu0 0
    %340 = vmatpush1.bf16.msra.mxu0 0
    %341 = vmatprep.subr.bf16.mxu0 0
    %342 = vmatpush1.bf16.msra.mxu0 0
    %343 = vmatprep.subr.bf16.mxu0 0
    %344 = vmatpush1.bf16.msra.mxu0 0
    %345 = vmatprep.mubr.bf16.mxu0 0
    %346 = vmatmul.mubr.bf16.gmra.mrb[0].mxu0 %v225
    %v347 = vpop.f32.mrb[0].mxu0
    %v348 = vadd.f32 %v113, %v347
    %v349 = vpop.f32.mrb[0].mxu0
    %v350 = vpop.f32.mrb[0].mxu0
    %v351 = vadd.f32 %v113, %v350
    %v352 = vpop.f32.mrb[0].mxu0
    %353 = vdwg.mxu0
    %v354 = vpack.c.bf16 %v268, %v264
    %v355 = vpack.c.bf16 %v309, %v305
    %v356 = vpack.c.bf16 %v311, %v307
    %v357 = vld [vmem:[#allocation3] sm:$0xf]
    %v358 = vld [vmem:[#allocation3 + $0x4] sm:$0xf]
    %v359 = vld [vmem:[#allocation3 + $0x8] sm:$0xf]
    %v360 = vld [vmem:[#allocation3 + $0xc] sm:$0xf]
    %v361 = vld [vmem:[#allocation3 + $0x10] sm:$0xf]
    %v362 = vld [vmem:[#allocation3 + $0x14] sm:$0xf]
    %v363 = vld [vmem:[#allocation3 + $0x18] sm:$0xf]
    %v364 = vld [vmem:[#allocation3 + $0x1c] sm:$0xf]
    %v365 = vld [vmem:[#allocation3 + $0x20] sm:$0xf]
    %v366 = vld [vmem:[#allocation3 + $0x24] sm:$0xf]
    %v367 = vld [vmem:[#allocation3 + $0x28] sm:$0xf]
    %v368 = vld [vmem:[#allocation3 + $0x2c] sm:$0xf]
    %v369 = vld [vmem:[#allocation3 + $0x30] sm:$0xf]
    %v370 = vld [vmem:[#allocation3 + $0x34] sm:$0xf]
    %v371 = vld [vmem:[#allocation3 + $0x38] sm:$0xf]
    %v372 = vld [vmem:[#allocation3 + $0x3c] sm:$0xf]
    %v373 = vld [vmem:[%s3] sm:$0xff]
    %v374 = vld [vmem:[%s3 + $0x8] sm:$0xff]
    %vm375 = vcmask 261120
    %v377 = vsel %vm375, %v354, 0
    %v380 = vsel %vm375, %v355, 0
    %382 = vmatprep.subr.bf16.mxu0 0
    %383 = vmatpush1.bf16.xpose.msra.mxu0 %v380
    %384 = vmatprep.subr.bf16.mxu0 0
    %385 = vmatpush1.bf16.xpose.msra.mxu0 0
    %386 = vmatprep.subr.bf16.mxu0 0
    %387 = vmatpush1.bf16.xpose.msra.mxu0 0
    %388 = vmatprep.subr.bf16.mxu0 0
    %389 = vmatpush1.bf16.xpose.msra.mxu0 0
    %390 = vmatprep.subr.bf16.mxu0 0
    %391 = vmatpush1.bf16.xpose.msra.mxu0 0
    %392 = vmatprep.subr.bf16.mxu0 0
    %393 = vmatpush1.bf16.xpose.msra.mxu0 0
    %394 = vmatprep.subr.bf16.mxu0 0
    %395 = vmatpush1.bf16.xpose.msra.mxu0 0
    %396 = vmatprep.subr.bf16.mxu0 0
    %397 = vmatpush1.bf16.xpose.msra.mxu0 0
    %398 = vmatprep.subr.bf16.mxu0 0
    %399 = vmatpush1.bf16.xpose.msra.mxu0 0
    %400 = vmatprep.subr.bf16.mxu0 0
    %401 = vmatpush1.bf16.xpose.msra.mxu0 0
    %402 = vmatprep.subr.bf16.mxu0 0
    %403 = vmatpush1.bf16.xpose.msra.mxu0 0
    %404 = vmatprep.subr.bf16.mxu0 0
    %405 = vmatpush1.bf16.xpose.msra.mxu0 0
    %406 = vmatprep.subr.bf16.mxu0 0
    %407 = vmatpush1.bf16.xpose.msra.mxu0 0
    %408 = vmatprep.subr.bf16.mxu0 0
    %409 = vmatpush1.bf16.xpose.msra.mxu0 0
    %410 = vmatprep.subr.bf16.mxu0 0
    %411 = vmatpush1.bf16.xpose.msra.mxu0 0
    %412 = vmatprep.subr.bf16.mxu0 0
    %413 = vmatpush1.bf16.xpose.msra.mxu0 0
    %414 = vmatprep.mubr.bf16.mxu0 0
    %415 = vmatmul.mubr.bf16.gmra.mrb[0].mxu0 %v377
    %v416 = vpop.f32.mrb[0].mxu0
    %v417 = vadd.f32 %v373, %v416
    %v418 = vpop.f32.mrb[0].mxu0
    %v419 = vpop.f32.mrb[0].mxu0
    %v420 = vadd.f32 %v374, %v419
    %v421 = vpop.f32.mrb[0].mxu0
    %422 = vdwg.mxu0
    %vm423 = vcmask 130048
    %v424 = vsel %vm423, %v417, -inf
    %425 = vmax.xlane.f32.xlu0 %v424
    %v426 = vpop.xlane.xlu0 %425
    %v427 = vsel %vm423, %v420, -inf
    %428 = vmax.xlane.f32.xlu0 %v427
    %v429 = vpop.xlane.xlu0 %428
    %v430 = vsub.f32 %v417, %v426
    %v431 = vsub.f32 %v420, %v429
    %v432 = vmul.f32 %v430, 1.442695
    %v433 = vpow.pop %v432
    %v434 = vmul.f32 %v431, 1.442695
    %v435 = vpow.pop %v434
    %v436 = vsel %vm423, %v433, 0.0
    %437 = vadd.xlane.f32.xlu0 %v436
    %v438 = vpop.xlane.xlu0 %437
    %v439 = vsel %vm423, %v435, 0.0
    %440 = vadd.xlane.f32.xlu0 %v439
    %v441 = vpop.xlane.xlu0 %440
    %v442 = vrcp.pop %v438
    %v443 = vrcp.pop %v441
    %v444 = vmul.f32 %v433, %v442
    %v445 = vmul.f32 %v435, %v443
    %v446 = vpack.c.bf16 %v445, %v444
    %v448 = vsel %vm423, %v446, 0
    %450 = vmatprep.subr.bf16.mxu0 0
    %451 = vmatpush1.bf16.msra.mxu0 %v356
    %452 = vmatprep.subr.bf16.mxu0 0
    %453 = vmatpush1.bf16.msra.mxu0 0
    %454 = vmatprep.subr.bf16.mxu0 0
    %455 = vmatpush1.bf16.msra.mxu0 0
    %456 = vmatprep.subr.bf16.mxu0 0
    %457 = vmatpush1.bf16.msra.mxu0 0
    %458 = vmatprep.subr.bf16.mxu0 0
    %459 = vmatpush1.bf16.msra.mxu0 0
    %460 = vmatprep.subr.bf16.mxu0 0
    %461 = vmatpush1.bf16.msra.mxu0 0
    %462 = vmatprep.subr.bf16.mxu0 0
    %463 = vmatpush1.bf16.msra.mxu0 0
    %464 = vmatprep.subr.bf16.mxu0 0
    %465 = vmatpush1.bf16.msra.mxu0 0
    %466 = vmatprep.subr.bf16.mxu0 0
    %467 = vmatpush1.bf16.msra.mxu0 0
    %468 = vmatprep.subr.bf16.mxu0 0
    %469 = vmatpush1.bf16.msra.mxu0 0
    %470 = vmatprep.subr.bf16.mxu0 0
    %471 = vmatpush1.bf16.msra.mxu0 0
    %472 = vmatprep.subr.bf16.mxu0 0
    %473 = vmatpush1.bf16.msra.mxu0 0
    %474 = vmatprep.subr.bf16.mxu0 0
    %475 = vmatpush1.bf16.msra.mxu0 0
    %476 = vmatprep.subr.bf16.mxu0 0
    %477 = vmatpush1.bf16.msra.mxu0 0
    %478 = vmatprep.subr.bf16.mxu0 0
    %479 = vmatpush1.bf16.msra.mxu0 0
    %480 = vmatprep.subr.bf16.mxu0 0
    %481 = vmatpush1.bf16.msra.mxu0 0
    %482 = vmatprep.mubr.bf16.mxu0 0
    %483 = vmatmul.mubr.bf16.gmra.mrb[0].mxu0 %v448
    %v484 = vpop.f32.mrb[0].mxu0
    %v485 = vadd.f32 0.0, %v484
    %v486 = vpop.f32.mrb[0].mxu0
    %v487 = vpop.f32.mrb[0].mxu0
    %v488 = vadd.f32 0.0, %v487
    %v489 = vpop.f32.mrb[0].mxu0
    %490 = vdwg.mxu0
    %v491 = vpack.c.bf16 %v488, %v485
    %493 = vrot.lane.b32.xlu0 %v354, 96
    %v494 = vpop.permute.xlu0 %493
    %496 = vrot.lane.b32.xlu0 %v355, 96
    %v497 = vpop.permute.xlu0 %496
    %v499 = vsel %vm375, %v494, 0
    %v502 = vsel %vm375, %v497, 0
    %504 = vmatprep.subr.bf16.mxu0 0
    %505 = vmatpush1.bf16.xpose.msra.mxu0 %v502
    %506 = vmatprep.subr.bf16.mxu0 0
    %507 = vmatpush1.bf16.xpose.msra.mxu0 0
    %508 = vmatprep.subr.bf16.mxu0 0
    %509 = vmatpush1.bf16.xpose.msra.mxu0 0
    %510 = vmatprep.subr.bf16.mxu0 0
    %511 = vmatpush1.bf16.xpose.msra.mxu0 0
    %512 = vmatprep.subr.bf16.mxu0 0
    %513 = vmatpush1.bf16.xpose.msra.mxu0 0
    %514 = vmatprep.subr.bf16.mxu0 0
    %515 = vmatpush1.bf16.xpose.msra.mxu0 0
    %516 = vmatprep.subr.bf16.mxu0 0
    %517 = vmatpush1.bf16.xpose.msra.mxu0 0
    %518 = vmatprep.subr.bf16.mxu0 0
    %519 = vmatpush1.bf16.xpose.msra.mxu0 0
    %520 = vmatprep.subr.bf16.mxu0 0
    %521 = vmatpush1.bf16.xpose.msra.mxu0 0
    %522 = vmatprep.subr.bf16.mxu0 0
    %523 = vmatpush1.bf16.xpose.msra.mxu0 0
    %524 = vmatprep.subr.bf16.mxu0 0
    %525 = vmatpush1.bf16.xpose.msra.mxu0 0
    %526 = vmatprep.subr.bf16.mxu0 0
    %527 = vmatpush1.bf16.xpose.msra.mxu0 0
    %528 = vmatprep.subr.bf16.mxu0 0
    %529 = vmatpush1.bf16.xpose.msra.mxu0 0
    %530 = vmatprep.subr.bf16.mxu0 0
    %531 = vmatpush1.bf16.xpose.msra.mxu0 0
    %532 = vmatprep.subr.bf16.mxu0 0
    %533 = vmatpush1.bf16.xpose.msra.mxu0 0
    %534 = vmatprep.subr.bf16.mxu0 0
    %535 = vmatpush1.bf16.xpose.msra.mxu0 0
    %536 = vmatprep.mubr.bf16.mxu0 0
    %537 = vmatmul.mubr.bf16.gmra.mrb[0].mxu0 %v499
    %v538 = vpop.f32.mrb[0].mxu0
    %v539 = vadd.f32 %v373, %v538
    %v540 = vpop.f32.mrb[0].mxu0
    %v541 = vpop.f32.mrb[0].mxu0
    %v542 = vadd.f32 %v374, %v541
    %v543 = vpop.f32.mrb[0].mxu0
    %544 = vdwg.mxu0
    %v545 = vsel %vm423, %v539, -inf
    %546 = vmax.xlane.f32.xlu0 %v545
    %v547 = vpop.xlane.xlu0 %546
    %v548 = vsel %vm423, %v542, -inf
    %549 = vmax.xlane.f32.xlu0 %v548
    %v550 = vpop.xlane.xlu0 %549
    %v551 = vsub.f32 %v539, %v547
    %v552 = vsub.f32 %v542, %v550
    %v553 = vmul.f32 %v551, 1.442695
    %v554 = vpow.pop %v553
    %v555 = vmul.f32 %v552, 1.442695
    %v556 = vpow.pop %v555
    %v557 = vsel %vm423, %v554, 0.0
    %558 = vadd.xlane.f32.xlu0 %v557
    %v559 = vpop.xlane.xlu0 %558
    %v560 = vsel %vm423, %v556, 0.0
    %561 = vadd.xlane.f32.xlu0 %v560
    %v562 = vpop.xlane.xlu0 %561
    %v563 = vrcp.pop %v559
    %v564 = vrcp.pop %v562
    %v565 = vmul.f32 %v554, %v563
    %v566 = vmul.f32 %v556, %v564
    %v567 = vpack.c.bf16 %v566, %v565
    %569 = vrot.lane.b32.xlu0 %v356, 96
    %v570 = vpop.permute.xlu0 %569
    %v573 = vsel %vm423, %v567, 0
    %575 = vmatprep.subr.bf16.mxu0 0
    %576 = vmatpush1.bf16.msra.mxu0 %v570
    %577 = vmatprep.subr.bf16.mxu0 0
    %578 = vmatpush1.bf16.msra.mxu0 0
    %579 = vmatprep.subr.bf16.mxu0 0
    %580 = vmatpush1.bf16.msra.mxu0 0
    %581 = vmatprep.subr.bf16.mxu0 0
    %582 = vmatpush1.bf16.msra.mxu0 0
    %583 = vmatprep.subr.bf16.mxu0 0
    %584 = vmatpush1.bf16.msra.mxu0 0
    %585 = vmatprep.subr.bf16.mxu0 0
    %586 = vmatpush1.bf16.msra.mxu0 0
    %587 = vmatprep.subr.bf16.mxu0 0
    %588 = vmatpush1.bf16.msra.mxu0 0
    %589 = vmatprep.subr.bf16.mxu0 0
    %590 = vmatpush1.bf16.msra.mxu0 0
    %591 = vmatprep.subr.bf16.mxu0 0
    %592 = vmatpush1.bf16.msra.mxu0 0
    %593 = vmatprep.subr.bf16.mxu0 0
    %594 = vmatpush1.bf16.msra.mxu0 0
    %595 = vmatprep.subr.bf16.mxu0 0
    %596 = vmatpush1.bf16.msra.mxu0 0
    %597 = vmatprep.subr.bf16.mxu0 0
    %598 = vmatpush1.bf16.msra.mxu0 0
    %599 = vmatprep.subr.bf16.mxu0 0
    %600 = vmatpush1.bf16.msra.mxu0 0
    %601 = vmatprep.subr.bf16.mxu0 0
    %602 = vmatpush1.bf16.msra.mxu0 0
    %603 = vmatprep.subr.bf16.mxu0 0
    %604 = vmatpush1.bf16.msra.mxu0 0
    %605 = vmatprep.subr.bf16.mxu0 0
    %606 = vmatpush1.bf16.msra.mxu0 0
    %607 = vmatprep.mubr.bf16.mxu0 0
    %608 = vmatmul.mubr.bf16.gmra.mrb[0].mxu0 %v573
    %v609 = vpop.f32.mrb[0].mxu0
    %v610 = vadd.f32 0.0, %v609
    %v611 = vpop.f32.mrb[0].mxu0
    %v612 = vpop.f32.mrb[0].mxu0
    %v613 = vadd.f32 0.0, %v612
    %v614 = vpop.f32.mrb[0].mxu0
    %615 = vdwg.mxu0
    %v616 = vpack.c.bf16 %v613, %v610
    %v621 = vunpack.c.l.b16 %v361
    %v622 = vunpack.c.l.b16 %v362
    %v623 = vunpack.c.l.b16 %v363
    %v624 = vunpack.c.l.b16 %v364
    %v625 = vpack.c.b16 %v622, %v621
    %v626 = vpack.c.b16 %v624, %v623
    %v630 = vsel %vm375, %v616, 0
    %632 = vmatprep.subr.bf16.mxu0 0
    %633 = vmatpush1.bf16.msra.mxu0 %v625
    %634 = vmatprep.subr.bf16.mxu0 0
    %635 = vmatpush1.bf16.msra.mxu0 %v626
    %636 = vmatprep.subr.bf16.mxu0 0
    %637 = vmatpush1.bf16.msra.mxu0 0
    %638 = vmatprep.subr.bf16.mxu0 0
    %639 = vmatpush1.bf16.msra.mxu0 0
    %640 = vmatprep.subr.bf16.mxu0 0
    %641 = vmatpush1.bf16.msra.mxu0 0
    %642 = vmatprep.subr.bf16.mxu0 0
    %643 = vmatpush1.bf16.msra.mxu0 0
    %644 = vmatprep.subr.bf16.mxu0 0
    %645 = vmatpush1.bf16.msra.mxu0 0
    %646 = vmatprep.subr.bf16.mxu0 0
    %647 = vmatpush1.bf16.msra.mxu0 0
    %648 = vmatprep.subr.bf16.mxu0 0
    %649 = vmatpush1.bf16.msra.mxu0 0
    %650 = vmatprep.subr.bf16.mxu0 0
    %651 = vmatpush1.bf16.msra.mxu0 0
    %652 = vmatprep.subr.bf16.mxu0 0
    %653 = vmatpush1.bf16.msra.mxu0 0
    %654 = vmatprep.subr.bf16.mxu0 0
    %655 = vmatpush1.bf16.msra.mxu0 0
    %656 = vmatprep.subr.bf16.mxu0 0
    %657 = vmatpush1.bf16.msra.mxu0 0
    %658 = vmatprep.subr.bf16.mxu0 0
    %659 = vmatpush1.bf16.msra.mxu0 0
    %660 = vmatprep.subr.bf16.mxu0 0
    %661 = vmatpush1.bf16.msra.mxu0 0
    %662 = vmatprep.subr.bf16.mxu0 0
    %663 = vmatpush1.bf16.msra.mxu0 0
    %664 = vmatprep.mubr.bf16.mxu0 0
    %665 = vmatmul.mubr.bf16.gmra.mrb[0].mxu0 %v630
    %v666 = vpop.f32.mrb[0].mxu0
    %v667 = vadd.f32 0.0, %v666
    %v668 = vpop.f32.mrb[0].mxu0
    %v669 = vpop.f32.mrb[0].mxu0
    %v670 = vadd.f32 0.0, %v669
    %v671 = vpop.f32.mrb[0].mxu0
    %672 = vdwg.mxu0
    %v677 = vunpack.c.l.b16 %v357
    %v678 = vunpack.c.l.b16 %v358
    %v679 = vunpack.c.l.b16 %v359
    %v680 = vunpack.c.l.b16 %v360
    %v681 = vpack.c.b16 %v678, %v677
    %v682 = vpack.c.b16 %v680, %v679
    %v686 = vsel %vm375, %v491, 0
    %688 = vmatprep.subr.bf16.mxu0 0
    %689 = vmatpush1.bf16.msra.mxu0 %v681
    %690 = vmatprep.subr.bf16.mxu0 0
    %691 = vmatpush1.bf16.msra.mxu0 %v682
    %692 = vmatprep.subr.bf16.mxu0 0
    %693 = vmatpush1.bf16.msra.mxu0 0
    %694 = vmatprep.subr.bf16.mxu0 0
    %695 = vmatpush1.bf16.msra.mxu0 0
    %696 = vmatprep.subr.bf16.mxu0 0
    %697 = vmatpush1.bf16.msra.mxu0 0
    %698 = vmatprep.subr.bf16.mxu0 0
    %699 = vmatpush1.bf16.msra.mxu0 0
    %700 = vmatprep.subr.bf16.mxu0 0
    %701 = vmatpush1.bf16.msra.mxu0 0
    %702 = vmatprep.subr.bf16.mxu0 0
    %703 = vmatpush1.bf16.msra.mxu0 0
    %704 = vmatprep.subr.bf16.mxu0 0
    %705 = vmatpush1.bf16.msra.mxu0 0
    %706 = vmatprep.subr.bf16.mxu0 0
    %707 = vmatpush1.bf16.msra.mxu0 0
    %708 = vmatprep.subr.bf16.mxu0 0
    %709 = vmatpush1.bf16.msra.mxu0 0
    %710 = vmatprep.subr.bf16.mxu0 0
    %711 = vmatpush1.bf16.msra.mxu0 0
    %712 = vmatprep.subr.bf16.mxu0 0
    %713 = vmatpush1.bf16.msra.mxu0 0
    %714 = vmatprep.subr.bf16.mxu0 0
    %715 = vmatpush1.bf16.msra.mxu0 0
    %716 = vmatprep.subr.bf16.mxu0 0
    %717 = vmatpush1.bf16.msra.mxu0 0
    %718 = vmatprep.subr.bf16.mxu0 0
    %719 = vmatpush1.bf16.msra.mxu0 0
    %720 = vmatprep.mubr.bf16.mxu0 0
    %721 = vmatmul.mubr.bf16.gmra.mrb[0].mxu0 %v686
    %v722 = vpop.f32.mrb[0].mxu0
    %v723 = vadd.f32 %v667, %v722
    %v724 = vpop.f32.mrb[0].mxu0
    %v725 = vpop.f32.mrb[0].mxu0
    %v726 = vadd.f32 %v670, %v725
    %v727 = vpop.f32.mrb[0].mxu0
    %728 = vdwg.mxu0
    %729 = vrot.lane.b32.xlu0 %v354, 64
    %v730 = vpop.permute.xlu0 %729
    %731 = vrot.lane.b32.xlu0 %v355, 64
    %v732 = vpop.permute.xlu0 %731
    %v734 = vsel %vm375, %v730, 0
    %v737 = vsel %vm375, %v732, 0
    %739 = vmatprep.subr.bf16.mxu0 0
    %740 = vmatpush1.bf16.xpose.msra.mxu0 %v737
    %741 = vmatprep.subr.bf16.mxu0 0
    %742 = vmatpush1.bf16.xpose.msra.mxu0 0
    %743 = vmatprep.subr.bf16.mxu0 0
    %744 = vmatpush1.bf16.xpose.msra.mxu0 0
    %745 = vmatprep.subr.bf16.mxu0 0
    %746 = vmatpush1.bf16.xpose.msra.mxu0 0
    %747 = vmatprep.subr.bf16.mxu0 0
    %748 = vmatpush1.bf16.xpose.msra.mxu0 0
    %749 = vmatprep.subr.bf16.mxu0 0
    %750 = vmatpush1.bf16.xpose.msra.mxu0 0
    %751 = vmatprep.subr.bf16.mxu0 0
    %752 = vmatpush1.bf16.xpose.msra.mxu0 0
    %753 = vmatprep.subr.bf16.mxu0 0
    %754 = vmatpush1.bf16.xpose.msra.mxu0 0
    %755 = vmatprep.subr.bf16.mxu0 0
    %756 = vmatpush1.bf16.xpose.msra.mxu0 0
    %757 = vmatprep.subr.bf16.mxu0 0
    %758 = vmatpush1.bf16.xpose.msra.mxu0 0
    %759 = vmatprep.subr.bf16.mxu0 0
    %760 = vmatpush1.bf16.xpose.msra.mxu0 0
    %761 = vmatprep.subr.bf16.mxu0 0
    %762 = vmatpush1.bf16.xpose.msra.mxu0 0
    %763 = vmatprep.subr.bf16.mxu0 0
    %764 = vmatpush1.bf16.xpose.msra.mxu0 0
    %765 = vmatprep.subr.bf16.mxu0 0
    %766 = vmatpush1.bf16.xpose.msra.mxu0 0
    %767 = vmatprep.subr.bf16.mxu0 0
    %768 = vmatpush1.bf16.xpose.msra.mxu0 0
    %769 = vmatprep.subr.bf16.mxu0 0
    %770 = vmatpush1.bf16.xpose.msra.mxu0 0
    %771 = vmatprep.mubr.bf16.mxu0 0
    %772 = vmatmul.mubr.bf16.gmra.mrb[0].mxu0 %v734
    %v773 = vpop.f32.mrb[0].mxu0
    %v774 = vadd.f32 %v373, %v773
    %v775 = vpop.f32.mrb[0].mxu0
    %v776 = vpop.f32.mrb[0].mxu0
    %v777 = vadd.f32 %v374, %v776
    %v778 = vpop.f32.mrb[0].mxu0
    %779 = vdwg.mxu0
    %v780 = vsel %vm423, %v774, -inf
    %781 = vmax.xlane.f32.xlu0 %v780
    %v782 = vpop.xlane.xlu0 %781
    %v783 = vsel %vm423, %v777, -inf
    %784 = vmax.xlane.f32.xlu0 %v783
    %v785 = vpop.xlane.xlu0 %784
    %v786 = vsub.f32 %v774, %v782
    %v787 = vsub.f32 %v777, %v785
    %v788 = vmul.f32 %v786, 1.442695
    %v789 = vpow.pop %v788
    %v790 = vmul.f32 %v787, 1.442695
    %v791 = vpow.pop %v790
    %v792 = vsel %vm423, %v789, 0.0
    %793 = vadd.xlane.f32.xlu0 %v792
    %v794 = vpop.xlane.xlu0 %793
    %v795 = vsel %vm423, %v791, 0.0
    %796 = vadd.xlane.f32.xlu0 %v795
    %v797 = vpop.xlane.xlu0 %796
    %v798 = vrcp.pop %v794
    %v799 = vrcp.pop %v797
    %v800 = vmul.f32 %v789, %v798
    %v801 = vmul.f32 %v791, %v799
    %v802 = vpack.c.bf16 %v801, %v800
    %803 = vrot.lane.b32.xlu0 %v356, 64
    %v804 = vpop.permute.xlu0 %803
    %v807 = vsel %vm423, %v802, 0
    %809 = vmatprep.subr.bf16.mxu0 0
    %810 = vmatpush1.bf16.msra.mxu0 %v804
    %811 = vmatprep.subr.bf16.mxu0 0
    %812 = vmatpush1.bf16.msra.mxu0 0
    %813 = vmatprep.subr.bf16.mxu0 0
    %814 = vmatpush1.bf16.msra.mxu0 0
    %815 = vmatprep.subr.bf16.mxu0 0
    %816 = vmatpush1.bf16.msra.mxu0 0
    %817 = vmatprep.subr.bf16.mxu0 0
    %818 = vmatpush1.bf16.msra.mxu0 0
    %819 = vmatprep.subr.bf16.mxu0 0
    %820 = vmatpush1.bf16.msra.mxu0 0
    %821 = vmatprep.subr.bf16.mxu0 0
    %822 = vmatpush1.bf16.msra.mxu0 0
    %823 = vmatprep.subr.bf16.mxu0 0
    %824 = vmatpush1.bf16.msra.mxu0 0
    %825 = vmatprep.subr.bf16.mxu0 0
    %826 = vmatpush1.bf16.msra.mxu0 0
    %827 = vmatprep.subr.bf16.mxu0 0
    %828 = vmatpush1.bf16.msra.mxu0 0
    %829 = vmatprep.subr.bf16.mxu0 0
    %830 = vmatpush1.bf16.msra.mxu0 0
    %831 = vmatprep.subr.bf16.mxu0 0
    %832 = vmatpush1.bf16.msra.mxu0 0
    %833 = vmatprep.subr.bf16.mxu0 0
    %834 = vmatpush1.bf16.msra.mxu0 0
    %835 = vmatprep.subr.bf16.mxu0 0
    %836 = vmatpush1.bf16.msra.mxu0 0
    %837 = vmatprep.subr.bf16.mxu0 0
    %838 = vmatpush1.bf16.msra.mxu0 0
    %839 = vmatprep.subr.bf16.mxu0 0
    %840 = vmatpush1.bf16.msra.mxu0 0
    %841 = vmatprep.mubr.bf16.mxu0 0
    %842 = vmatmul.mubr.bf16.gmra.mrb[0].mxu0 %v807
    %v843 = vpop.f32.mrb[0].mxu0
    %v844 = vadd.f32 0.0, %v843
    %v845 = vpop.f32.mrb[0].mxu0
    %v846 = vpop.f32.mrb[0].mxu0
    %v847 = vadd.f32 0.0, %v846
    %v848 = vpop.f32.mrb[0].mxu0
    %849 = vdwg.mxu0
    %v850 = vpack.c.bf16 %v847, %v844
    %v855 = vunpack.c.l.b16 %v365
    %v856 = vunpack.c.l.b16 %v366
    %v857 = vunpack.c.l.b16 %v367
    %v858 = vunpack.c.l.b16 %v368
    %v859 = vpack.c.b16 %v856, %v855
    %v860 = vpack.c.b16 %v858, %v857
    %v864 = vsel %vm375, %v850, 0
    %866 = vmatprep.subr.bf16.mxu0 0
    %867 = vmatpush1.bf16.msra.mxu0 %v859
    %868 = vmatprep.subr.bf16.mxu0 0
    %869 = vmatpush1.bf16.msra.mxu0 %v860
    %870 = vmatprep.subr.bf16.mxu0 0
    %871 = vmatpush1.bf16.msra.mxu0 0
    %872 = vmatprep.subr.bf16.mxu0 0
    %873 = vmatpush1.bf16.msra.mxu0 0
    %874 = vmatprep.subr.bf16.mxu0 0
    %875 = vmatpush1.bf16.msra.mxu0 0
    %876 = vmatprep.subr.bf16.mxu0 0
    %877 = vmatpush1.bf16.msra.mxu0 0
    %878 = vmatprep.subr.bf16.mxu0 0
    %879 = vmatpush1.bf16.msra.mxu0 0
    %880 = vmatprep.subr.bf16.mxu0 0
    %881 = vmatpush1.bf16.msra.mxu0 0
    %882 = vmatprep.subr.bf16.mxu0 0
    %883 = vmatpush1.bf16.msra.mxu0 0
    %884 = vmatprep.subr.bf16.mxu0 0
    %885 = vmatpush1.bf16.msra.mxu0 0
    %886 = vmatprep.subr.bf16.mxu0 0
    %887 = vmatpush1.bf16.msra.mxu0 0
    %888 = vmatprep.subr.bf16.mxu0 0
    %889 = vmatpush1.bf16.msra.mxu0 0
    %890 = vmatprep.subr.bf16.mxu0 0
    %891 = vmatpush1.bf16.msra.mxu0 0
    %892 = vmatprep.subr.bf16.mxu0 0
    %893 = vmatpush1.bf16.msra.mxu0 0
    %894 = vmatprep.subr.bf16.mxu0 0
    %895 = vmatpush1.bf16.msra.mxu0 0
    %896 = vmatprep.subr.bf16.mxu0 0
    %897 = vmatpush1.bf16.msra.mxu0 0
    %898 = vmatprep.mubr.bf16.mxu0 0
    %899 = vmatmul.mubr.bf16.gmra.mrb[0].mxu0 %v864
    %v900 = vpop.f32.mrb[0].mxu0
    %v901 = vadd.f32 0.0, %v900
    %v902 = vpop.f32.mrb[0].mxu0
    %v903 = vpop.f32.mrb[0].mxu0
    %v904 = vadd.f32 0.0, %v903
    %v905 = vpop.f32.mrb[0].mxu0
    %906 = vdwg.mxu0
    %v907 = vadd.f32 %v723, %v901
    %v908 = vadd.f32 %v726, %v904
    %909 = vrot.lane.b32.xlu0 %v354, 32
    %v910 = vpop.permute.xlu0 %909
    %911 = vrot.lane.b32.xlu0 %v355, 32
    %v912 = vpop.permute.xlu0 %911
    %v914 = vsel %vm375, %v910, 0
    %v917 = vsel %vm375, %v912, 0
    %919 = vmatprep.subr.bf16.mxu0 0
    %920 = vmatpush1.bf16.xpose.msra.mxu0 %v917
    %921 = vmatprep.subr.bf16.mxu0 0
    %922 = vmatpush1.bf16.xpose.msra.mxu0 0
    %923 = vmatprep.subr.bf16.mxu0 0
    %924 = vmatpush1.bf16.xpose.msra.mxu0 0
    %925 = vmatprep.subr.bf16.mxu0 0
    %926 = vmatpush1.bf16.xpose.msra.mxu0 0
    %927 = vmatprep.subr.bf16.mxu0 0
    %928 = vmatpush1.bf16.xpose.msra.mxu0 0
    %929 = vmatprep.subr.bf16.mxu0 0
    %930 = vmatpush1.bf16.xpose.msra.mxu0 0
    %931 = vmatprep.subr.bf16.mxu0 0
    %932 = vmatpush1.bf16.xpose.msra.mxu0 0
    %933 = vmatprep.subr.bf16.mxu0 0
    %934 = vmatpush1.bf16.xpose.msra.mxu0 0
    %935 = vmatprep.subr.bf16.mxu0 0
    %936 = vmatpush1.bf16.xpose.msra.mxu0 0
    %937 = vmatprep.subr.bf16.mxu0 0
    %938 = vmatpush1.bf16.xpose.msra.mxu0 0
    %939 = vmatprep.subr.bf16.mxu0 0
    %940 = vmatpush1.bf16.xpose.msra.mxu0 0
    %941 = vmatprep.subr.bf16.mxu0 0
    %942 = vmatpush1.bf16.xpose.msra.mxu0 0
    %943 = vmatprep.subr.bf16.mxu0 0
    %944 = vmatpush1.bf16.xpose.msra.mxu0 0
    %945 = vmatprep.subr.bf16.mxu0 0
    %946 = vmatpush1.bf16.xpose.msra.mxu0 0
    %947 = vmatprep.subr.bf16.mxu0 0
    %948 = vmatpush1.bf16.xpose.msra.mxu0 0
    %949 = vmatprep.subr.bf16.mxu0 0
    %950 = vmatpush1.bf16.xpose.msra.mxu0 0
    %951 = vmatprep.mubr.bf16.mxu0 0
    %952 = vmatmul.mubr.bf16.gmra.mrb[0].mxu0 %v914
    %v953 = vpop.f32.mrb[0].mxu0
    %v954 = vadd.f32 %v373, %v953
    %v955 = vpop.f32.mrb[0].mxu0
    %v956 = vpop.f32.mrb[0].mxu0
    %v957 = vadd.f32 %v374, %v956
    %v958 = vpop.f32.mrb[0].mxu0
    %959 = vdwg.mxu0
    %v960 = vsel %vm423, %v954, -inf
    %961 = vmax.xlane.f32.xlu0 %v960
    %v962 = vpop.xlane.xlu0 %961
    %v963 = vsel %vm423, %v957, -inf
    %964 = vmax.xlane.f32.xlu0 %v963
    %v965 = vpop.xlane.xlu0 %964
    %v966 = vsub.f32 %v954, %v962
    %v967 = vsub.f32 %v957, %v965
    %v968 = vmul.f32 %v966, 1.442695
    %v969 = vpow.pop %v968
    %v970 = vmul.f32 %v967, 1.442695
    %v971 = vpow.pop %v970
    %v972 = vsel %vm423, %v969, 0.0
    %973 = vadd.xlane.f32.xlu0 %v972
    %v974 = vpop.xlane.xlu0 %973
    %v975 = vsel %vm423, %v971, 0.0
    %976 = vadd.xlane.f32.xlu0 %v975
    %v977 = vpop.xlane.xlu0 %976
    %v978 = vrcp.pop %v974
    %v979 = vrcp.pop %v977
    %v980 = vmul.f32 %v969, %v978
    %v981 = vmul.f32 %v971, %v979
    %v982 = vpack.c.bf16 %v981, %v980
    %983 = vrot.lane.b32.xlu0 %v356, 32
    %v984 = vpop.permute.xlu0 %983
    %v987 = vsel %vm423, %v982, 0
    %989 = vmatprep.subr.bf16.mxu0 0
    %990 = vmatpush1.bf16.msra.mxu0 %v984
    %991 = vmatprep.subr.bf16.mxu0 0
    %992 = vmatpush1.bf16.msra.mxu0 0
    %993 = vmatprep.subr.bf16.mxu0 0
    %994 = vmatpush1.bf16.msra.mxu0 0
    %995 = vmatprep.subr.bf16.mxu0 0
    %996 = vmatpush1.bf16.msra.mxu0 0
    %997 = vmatprep.subr.bf16.mxu0 0
    %998 = vmatpush1.bf16.msra.mxu0 0
    %999 = vmatprep.subr.bf16.mxu0 0
    %1000 = vmatpush1.bf16.msra.mxu0 0
    %1001 = vmatprep.subr.bf16.mxu0 0
    %1002 = vmatpush1.bf16.msra.mxu0 0
    %1003 = vmatprep.subr.bf16.mxu0 0
    %1004 = vmatpush1.bf16.msra.mxu0 0
    %1005 = vmatprep.subr.bf16.mxu0 0
    %1006 = vmatpush1.bf16.msra.mxu0 0
    %1007 = vmatprep.subr.bf16.mxu0 0
    %1008 = vmatpush1.bf16.msra.mxu0 0
    %1009 = vmatprep.subr.bf16.mxu0 0
    %1010 = vmatpush1.bf16.msra.mxu0 0
    %1011 = vmatprep.subr.bf16.mxu0 0
    %1012 = vmatpush1.bf16.msra.mxu0 0
    %1013 = vmatprep.subr.bf16.mxu0 0
    %1014 = vmatpush1.bf16.msra.mxu0 0
    %1015 = vmatprep.subr.bf16.mxu0 0
    %1016 = vmatpush1.bf16.msra.mxu0 0
    %1017 = vmatprep.subr.bf16.mxu0 0
    %1018 = vmatpush1.bf16.msra.mxu0 0
    %1019 = vmatprep.subr.bf16.mxu0 0
    %1020 = vmatpush1.bf16.msra.mxu0 0
    %1021 = vmatprep.mubr.bf16.mxu0 0
    %1022 = vmatmul.mubr.bf16.gmra.mrb[0].mxu0 %v987
    %v1023 = vpop.f32.mrb[0].mxu0
    %v1024 = vadd.f32 0.0, %v1023
    %v1025 = vpop.f32.mrb[0].mxu0
    %v1026 = vpop.f32.mrb[0].mxu0
    %v1027 = vadd.f32 0.0, %v1026
    %v1028 = vpop.f32.mrb[0].mxu0
    %1029 = vdwg.mxu0
    %v1030 = vpack.c.bf16 %v1027, %v1024
    %v1035 = vunpack.c.l.b16 %v369
    %v1036 = vunpack.c.l.b16 %v370
    %v1037 = vunpack.c.l.b16 %v371
    %v1038 = vunpack.c.l.b16 %v372
    %v1039 = vpack.c.b16 %v1036, %v1035
    %v1040 = vpack.c.b16 %v1038, %v1037
    %v1044 = vsel %vm375, %v1030, 0
    %1046 = vmatprep.subr.bf16.mxu0 0
    %1047 = vmatpush1.bf16.msra.mxu0 %v1039
    %1048 = vmatprep.subr.bf16.mxu0 0
    %1049 = vmatpush1.bf16.msra.mxu0 %v1040
    %1050 = vmatprep.subr.bf16.mxu0 0
    %1051 = vmatpush1.bf16.msra.mxu0 0
    %1052 = vmatprep.subr.bf16.mxu0 0
    %1053 = vmatpush1.bf16.msra.mxu0 0
    %1054 = vmatprep.subr.bf16.mxu0 0
    %1055 = vmatpush1.bf16.msra.mxu0 0
    %1056 = vmatprep.subr.bf16.mxu0 0
    %1057 = vmatpush1.bf16.msra.mxu0 0
    %1058 = vmatprep.subr.bf16.mxu0 0
    %1059 = vmatpush1.bf16.msra.mxu0 0
    %1060 = vmatprep.subr.bf16.mxu0 0
    %1061 = vmatpush1.bf16.msra.mxu0 0
    %1062 = vmatprep.subr.bf16.mxu0 0
    %1063 = vmatpush1.bf16.msra.mxu0 0
    %1064 = vmatprep.subr.bf16.mxu0 0
    %1065 = vmatpush1.bf16.msra.mxu0 0
    %1066 = vmatprep.subr.bf16.mxu0 0
    %1067 = vmatpush1.bf16.msra.mxu0 0
    %1068 = vmatprep.subr.bf16.mxu0 0
    %1069 = vmatpush1.bf16.msra.mxu0 0
    %1070 = vmatprep.subr.bf16.mxu0 0
    %1071 = vmatpush1.bf16.msra.mxu0 0
    %1072 = vmatprep.subr.bf16.mxu0 0
    %1073 = vmatpush1.bf16.msra.mxu0 0
    %1074 = vmatprep.subr.bf16.mxu0 0
    %1075 = vmatpush1.bf16.msra.mxu0 0
    %1076 = vmatprep.subr.bf16.mxu0 0
    %1077 = vmatpush1.bf16.msra.mxu0 0
    %1078 = vmatprep.mubr.bf16.mxu0 0
    %1079 = vmatmul.mubr.bf16.gmra.mrb[0].mxu0 %v1044
    %v1080 = vpop.f32.mrb[0].mxu0
    %v1081 = vadd.f32 0.0, %v1080
    %v1082 = vpop.f32.mrb[0].mxu0
    %v1083 = vpop.f32.mrb[0].mxu0
    %v1084 = vadd.f32 0.0, %v1083
    %v1085 = vpop.f32.mrb[0].mxu0
    %1086 = vdwg.mxu0
    %v1087 = vadd.f32 %v907, %v1081
    %v1088 = vadd.f32 %v908, %v1084
    %v1089 = vld [vmem:[%s5] sm:$0x1]
    %v1091 = vlaneseq
    %v1092 = vshrl.u32 %v1091, 7
    %v1093 = vsub.s32 0, %v1092
    %v1094 = vrot.slane %v1089, %v1093
    %v1096 = vadd.f32 %v1087, %v1094
    %v1097 = vadd.f32 %v1088, %v1094
    %v1098 = vadd.f32 %v262, %v1096
    %v1099 = vadd.f32 %v266, %v1097
    %1100 = vadd.xlane.f32.xlu0 %v1098
    %v1101 = vpop.xlane.xlu0 %1100
    %1102 = vadd.xlane.f32.xlu0 %v1099
    %v1103 = vpop.xlane.xlu0 %1102
    %v1104 = vrcp.pop 128.0
    %v1105 = vmul.f32 %v1101, %v1104
    %v1106 = vmul.f32 %v1103, %v1104
    %v1107 = vsub.f32 %v1098, %v1105
    %v1108 = vsub.f32 %v1099, %v1106
    %v1109 = vmul.f32 %v1107, %v1107
    %v1110 = vmul.f32 %v1108, %v1108
    %1111 = vadd.xlane.f32.xlu0 %v1109
    %v1112 = vpop.xlane.xlu0 %1111
    %1113 = vadd.xlane.f32.xlu0 %v1110
    %v1114 = vpop.xlane.xlu0 %1113
    %v1115 = vmul.f32 %v1112, %v1104
    %v1116 = vmul.f32 %v1114, %v1104
    %v1117 = vadd.f32 %v1115, 1e-05
    %v1118 = vadd.f32 %v1116, 1e-05
    %v1119 = vrsqrt.pop %v1117
    %v1120 = vrsqrt.pop %v1118
    %v1121 = vmul.f32 %v1107, %v1119
    %v1122 = vmul.f32 %v1108, %v1120
    %v1123 = vld [vmem:[%s6] sm:$0x1]
    %v1125 = vlaneseq
    %v1126 = vshrl.u32 %v1125, 7
    %v1127 = vsub.s32 0, %v1126
    %v1128 = vrot.slane %v1123, %v1127
    %v1130 = vmul.f32 %v1121, %v1128
    %v1131 = vmul.f32 %v1122, %v1128
    %v1132 = vld [vmem:[%s7] sm:$0x1]
    %v1134 = vlaneseq
    %v1135 = vshrl.u32 %v1134, 7
    %v1136 = vsub.s32 0, %v1135
    %v1137 = vrot.slane %v1132, %v1136
    %v1139 = vadd.f32 %v1130, %v1137
    %v1140 = vadd.f32 %v1131, %v1137
    %v1141 = vpack.c.bf16 %v1140, %v1139
    %v1142 = vld [vmem:[#allocation5] sm:$0xff]
    %v1143 = vld [vmem:[#allocation5 + $0x8] sm:$0xff]
    %v1144 = vld [vmem:[#allocation5 + $0x10] sm:$0xff]
    %v1145 = vld [vmem:[#allocation5 + $0x18] sm:$0xff]
    %v1146 = vld [vmem:[#allocation5 + $0x20] sm:$0xff]
    %v1147 = vld [vmem:[#allocation5 + $0x28] sm:$0xff]
    %v1148 = vld [vmem:[#allocation5 + $0x30] sm:$0xff]
    %v1149 = vld [vmem:[#allocation5 + $0x38] sm:$0xff]
    %v1150 = vld [vmem:[#allocation5 + $0x40] sm:$0xff]
    %v1151 = vld [vmem:[#allocation5 + $0x48] sm:$0xff]
    %v1152 = vld [vmem:[#allocation5 + $0x50] sm:$0xff]
    %v1153 = vld [vmem:[#allocation5 + $0x58] sm:$0xff]
    %v1154 = vld [vmem:[#allocation5 + $0x60] sm:$0xff]
    %v1155 = vld [vmem:[#allocation5 + $0x68] sm:$0xff]
    %v1156 = vld [vmem:[#allocation5 + $0x70] sm:$0xff]
    %v1157 = vld [vmem:[#allocation5 + $0x78] sm:$0xff]
    %v1174 = vunpack.c.l.b16 %v1142
    %v1175 = vunpack.c.h.b16 %v1142
    %v1176 = vunpack.c.l.b16 %v1143
    %v1177 = vunpack.c.h.b16 %v1143
    %v1178 = vunpack.c.l.b16 %v1144
    %v1179 = vunpack.c.h.b16 %v1144
    %v1180 = vunpack.c.l.b16 %v1145
    %v1181 = vunpack.c.h.b16 %v1145
    %v1182 = vunpack.c.l.b16 %v1146
    %v1183 = vunpack.c.h.b16 %v1146
    %v1184 = vunpack.c.l.b16 %v1147
    %v1185 = vunpack.c.h.b16 %v1147
    %v1186 = vunpack.c.l.b16 %v1148
    %v1187 = vunpack.c.h.b16 %v1148
    %v1188 = vunpack.c.l.b16 %v1149
    %v1189 = vunpack.c.h.b16 %v1149
    %v1190 = vunpack.c.l.b16 %v1150
    %v1191 = vunpack.c.h.b16 %v1150
    %v1192 = vunpack.c.l.b16 %v1151
    %v1193 = vunpack.c.h.b16 %v1151
    %v1194 = vunpack.c.l.b16 %v1152
    %v1195 = vunpack.c.h.b16 %v1152
    %v1196 = vunpack.c.l.b16 %v1153
    %v1197 = vunpack.c.h.b16 %v1153
    %v1198 = vunpack.c.l.b16 %v1154
    %v1199 = vunpack.c.h.b16 %v1154
    %v1200 = vunpack.c.l.b16 %v1155
    %v1201 = vunpack.c.h.b16 %v1155
    %v1202 = vunpack.c.l.b16 %v1156
    %v1203 = vunpack.c.h.b16 %v1156
    %v1204 = vunpack.c.l.b16 %v1157
    %v1205 = vunpack.c.h.b16 %v1157
    %v1206 = vpack.c.b16 %v1176, %v1174
    %v1207 = vpack.c.b16 %v1177, %v1175
    %v1208 = vpack.c.b16 %v1180, %v1178
    %v1209 = vpack.c.b16 %v1181, %v1179
    %v1210 = vpack.c.b16 %v1184, %v1182
    %v1211 = vpack.c.b16 %v1185, %v1183
    %v1212 = vpack.c.b16 %v1188, %v1186
    %v1213 = vpack.c.b16 %v1189, %v1187
    %v1214 = vpack.c.b16 %v1192, %v1190
    %v1215 = vpack.c.b16 %v1193, %v1191
    %v1216 = vpack.c.b16 %v1196, %v1194
    %v1217 = vpack.c.b16 %v1197, %v1195
    %v1218 = vpack.c.b16 %v1200, %v1198
    %v1219 = vpack.c.b16 %v1201, %v1199
    %v1220 = vpack.c.b16 %v1204, %v1202
    %v1221 = vpack.c.b16 %v1205, %v1203
    %1238 = vmatprep.subr.bf16.mxu0 %v1207
    %1239 = vmatpush1.bf16.msra.mxu0 %v1206
    %1240 = vmatprep.subr.bf16.mxu0 %v1209
    %1241 = vmatpush1.bf16.msra.mxu0 %v1208
    %1242 = vmatprep.subr.bf16.mxu0 %v1211
    %1243 = vmatpush1.bf16.msra.mxu0 %v1210
    %1244 = vmatprep.subr.bf16.mxu0 %v1213
    %1245 = vmatpush1.bf16.msra.mxu0 %v1212
    %1246 = vmatprep.subr.bf16.mxu0 %v1215
    %1247 = vmatpush1.bf16.msra.mxu0 %v1214
    %1248 = vmatprep.subr.bf16.mxu0 %v1217
    %1249 = vmatpush1.bf16.msra.mxu0 %v1216
    %1250 = vmatprep.subr.bf16.mxu0 %v1219
    %1251 = vmatpush1.bf16.msra.mxu0 %v1218
    %1252 = vmatprep.subr.bf16.mxu0 %v1221
    %1253 = vmatpush1.bf16.msra.mxu0 %v1220
    %1254 = vmatprep.subr.bf16.mxu0 0
    %1255 = vmatpush1.bf16.msra.mxu0 0
    %1256 = vmatprep.subr.bf16.mxu0 0
    %1257 = vmatpush1.bf16.msra.mxu0 0
    %1258 = vmatprep.subr.bf16.mxu0 0
    %1259 = vmatpush1.bf16.msra.mxu0 0
    %1260 = vmatprep.subr.bf16.mxu0 0
    %1261 = vmatpush1.bf16.msra.mxu0 0
    %1262 = vmatprep.subr.bf16.mxu0 0
    %1263 = vmatpush1.bf16.msra.mxu0 0
    %1264 = vmatprep.subr.bf16.mxu0 0
    %1265 = vmatpush1.bf16.msra.mxu0 0
    %1266 = vmatprep.subr.bf16.mxu0 0
    %1267 = vmatpush1.bf16.msra.mxu0 0
    %1268 = vmatprep.subr.bf16.mxu0 0
    %1269 = vmatpush1.bf16.msra.mxu0 0
    %1270 = vmatprep.mubr.bf16.mxu0 0
    %1271 = vmatmul.mubr.bf16.gmra.mrb[0].mxu0 %v1141
    %v1272 = vpop.f32.mrb[0].mxu0
    %v1273 = vadd.f32 0.0, %v1272
    %v1274 = vpop.f32.mrb[0].mxu0
    %v1275 = vadd.f32 0.0, %v1274
    %v1276 = vpop.f32.mrb[0].mxu0
    %v1277 = vadd.f32 0.0, %v1276
    %v1278 = vpop.f32.mrb[0].mxu0
    %v1279 = vadd.f32 0.0, %v1278
    %1280 = vdwg.mxu0
    %s1281 = sld [smem:[#allocation2]]
    %v1282 = vpack.c.bf16 %v1273, %v1273
    %v1283 = vpack.c.bf16 %v1139, %v1139
    %v1284 = vstv %s1281
    %1285 = vmatprep.subr.bf16.mxu0 0
    %1286 = vmatpush1.bf16.xpose.msra.mxu0 %v1283
    %1287 = vmatprep.subr.bf16.mxu0 0
    %1288 = vmatpush1.bf16.xpose.msra.mxu0 0
    %1289 = vmatprep.subr.bf16.mxu0 0
    %1290 = vmatpush1.bf16.xpose.msra.mxu0 0
    %1291 = vmatprep.subr.bf16.mxu0 0
    %1292 = vmatpush1.bf16.xpose.msra.mxu0 0
    %1293 = vmatprep.subr.bf16.mxu0 0
    %1294 = vmatpush1.bf16.xpose.msra.mxu0 0
    %1295 = vmatprep.subr.bf16.mxu0 0
    %1296 = vmatpush1.bf16.xpose.msra.mxu0 0
    %1297 = vmatprep.subr.bf16.mxu0 0
    %1298 = vmatpush1.bf16.xpose.msra.mxu0 0
    %1299 = vmatprep.subr.bf16.mxu0 0
    %1300 = vmatpush1.bf16.xpose.msra.mxu0 0
    %1301 = vmatprep.subr.bf16.mxu0 0
    %1302 = vmatpush1.bf16.xpose.msra.mxu0 0
    %1303 = vmatprep.subr.bf16.mxu0 0
    %1304 = vmatpush1.bf16.xpose.msra.mxu0 0
    %1305 = vmatprep.subr.bf16.mxu0 0
    %1306 = vmatpush1.bf16.xpose.msra.mxu0 0
    %1307 = vmatprep.subr.bf16.mxu0 0
    %1308 = vmatpush1.bf16.xpose.msra.mxu0 0
    %1309 = vmatprep.subr.bf16.mxu0 0
    %1310 = vmatpush1.bf16.xpose.msra.mxu0 0
    %1311 = vmatprep.subr.bf16.mxu0 0
    %1312 = vmatpush1.bf16.xpose.msra.mxu0 0
    %1313 = vmatprep.subr.bf16.mxu0 0
    %1314 = vmatpush1.bf16.xpose.msra.mxu0 0
    %1315 = vmatprep.subr.bf16.mxu0 0
    %1316 = vmatpush1.bf16.xpose.msra.mxu0 0
    %1317 = vmatprep.mubr.bf16.mxu0 0
    %1318 = vmatmul.mubr.bf16.gmra.mrb[0].mxu0 %v1282
    %v1319 = vpop.f32.mrb[0].mxu0
    %v1320 = vadd.f32 %v1284, %v1319
    %v1321 = vpop.f32.mrb[0].mxu0
    %v1322 = vpop.f32.mrb[0].mxu0
    %v1323 = vpop.f32.mrb[0].mxu0
    %1324 = vdwg.mxu0
    %v1325 = vpack.c.bf16 %v1277, %v1277
    %v1326 = vpack.c.bf16 %v1140, %v1140
    %1327 = vmatprep.subr.bf16.mxu0 0
    %1328 = vmatpush1.bf16.xpose.msra.mxu0 %v1326
    %1329 = vmatprep.subr.bf16.mxu0 0
    %1330 = vmatpush1.bf16.xpose.msra.mxu0 0
    %1331 = vmatprep.subr.bf16.mxu0 0
    %1332 = vmatpush1.bf16.xpose.msra.mxu0 0
    %1333 = vmatprep.subr.bf16.mxu0 0
    %1334 = vmatpush1.bf16.xpose.msra.mxu0 0
    %1335 = vmatprep.subr.bf16.mxu0 0
    %1336 = vmatpush1.bf16.xpose.msra.mxu0 0
    %1337 = vmatprep.subr.bf16.mxu0 0
    %1338 = vmatpush1.bf16.xpose.msra.mxu0 0
    %1339 = vmatprep.subr.bf16.mxu0 0
    %1340 = vmatpush1.bf16.xpose.msra.mxu0 0
    %1341 = vmatprep.subr.bf16.mxu0 0
    %1342 = vmatpush1.bf16.xpose.msra.mxu0 0
    %1343 = vmatprep.subr.bf16.mxu0 0
    %1344 = vmatpush1.bf16.xpose.msra.mxu0 0
    %1345 = vmatprep.subr.bf16.mxu0 0
    %1346 = vmatpush1.bf16.xpose.msra.mxu0 0
    %1347 = vmatprep.subr.bf16.mxu0 0
    %1348 = vmatpush1.bf16.xpose.msra.mxu0 0
    %1349 = vmatprep.subr.bf16.mxu0 0
    %1350 = vmatpush1.bf16.xpose.msra.mxu0 0
    %1351 = vmatprep.subr.bf16.mxu0 0
    %1352 = vmatpush1.bf16.xpose.msra.mxu0 0
    %1353 = vmatprep.subr.bf16.mxu0 0
    %1354 = vmatpush1.bf16.xpose.msra.mxu0 0
    %1355 = vmatprep.subr.bf16.mxu0 0
    %1356 = vmatpush1.bf16.xpose.msra.mxu0 0
    %1357 = vmatprep.subr.bf16.mxu0 0
    %1358 = vmatpush1.bf16.xpose.msra.mxu0 0
    %1359 = vmatprep.mubr.bf16.mxu0 0
    %1360 = vmatmul.mubr.bf16.gmra.mrb[0].mxu0 %v1325
    %v1361 = vpop.f32.mrb[0].mxu0
    %v1362 = vadd.f32 %v1284, %v1361
    %v1363 = vpop.f32.mrb[0].mxu0
    %v1364 = vpop.f32.mrb[0].mxu0
    %v1365 = vpop.f32.mrb[0].mxu0
    %1366 = vdwg.mxu0
    %1369 = vrot.lane.b32.xlu0 %v1320, 48
    %v1370 = vpop.permute.xlu0 %1369
    %1371 = vrot.lane.b32.xlu0 %v1362, 48
    %v1372 = vpop.permute.xlu0 %1371
    %1377 = vrot.lane.b32.xlu0 %v1275, 56
    %v1378 = vpop.permute.xlu0 %1377
    %1379 = vrot.lane.b32.xlu0 %v1279, 56
    %v1380 = vpop.permute.xlu0 %1379
    %vm1383 = vcmask 392192
    %v1384 = vsel %vm1383, %v348, %v1370
    %v1385 = vsel %vm1383, %v351, %v1372
    %vm1386 = vcmask 457728
    %v1387 = vsel %vm1386, %v1384, %v1378
    %v1388 = vsel %vm1386, %v1385, %v1380
    %vm1389 = vcmask 539648
    %v1390 = vsel %vm1389, %v1387, 0.0
    %v1391 = vsel %vm1389, %v1388, 0.0
    %1392 = vst [vmem:[%s10] sm:$0xff] %v1390
    %1393 = vst [vmem:[%s10 + $0x8] sm:$0xff] %v1391
    // Predicated region
    $region50: #{multi_task_forward.1} parent=1 // pred_check
      _
    $region51: #{multi_task_forward.1} parent=1 // pred_check_branch
      %1395 = sbr.rel (0) target = $region53
    $region52: #{multi_task_forward.1} parent=1 // pred_region
      _
    $region53: #{multi_task_forward.1} parent=1 // pred_fallthru
      _
    // Predicated region
    $region54: #{multi_task_forward.1} parent=1 // pred_check
      _
    $region55: #{multi_task_forward.1} parent=1 // pred_check_branch
      %1397 = sbr.rel (0) target = $region57
    $region56: #{multi_task_forward.1} parent=1 // pred_region
      _
    $region57: #{multi_task_forward.1} parent=1 // pred_fallthru
      _
    %1398 = vsyncpa [#allocation4], 1
    %1399 = vsyncpa [#allocation6], 1

</llo_original>
